<compile_context>
chip_gen: v6e
topology: v6e:2x2x1
jax: 0.10.0
libtpu: 0.0.40
codegen_flags: <defaults>
</compile_context>

<pallas_src>
import functools
import math

import jax
import jax.numpy as jnp
import numpy as np
from jax.experimental import pallas as pl
from jax.experimental.pallas import tpu as pltpu

# Module hyper-parameters (match the PyTorch defaults; lane friendly).
VOXEL_DIM = 128     # C
TEXT_DIM = 512      # text feature dim
HIDDEN_DIM = 128    # attention embed dim
N_HEADS = 4
HEAD_DIM = HIDDEN_DIM // N_HEADS


def _cross_attn_kernel(x_ref, wqc_ref, bqc_ref, kbd_ref, vbd_ref,
                       woc_ref, boc_ref, out_ref, *, n_heads, t_len):
    """One grid step = TN voxel rows (batch folded into the row axis)."""
    x = x_ref[...]                                                     # (TN, C) bf16

    # Fused voxel_proj ∘ q-projection (softmax scale folded into the weights).
    q = jnp.dot(x, wqc_ref[...],
                preferred_element_type=jnp.float32) + bqc_ref[...]     # (TN, H) f32

    # Packed per-head scores: block-diagonal K^T gives all heads in one matmul.
    s = jnp.dot(q.astype(x.dtype), kbd_ref[...],
                preferred_element_type=jnp.float32)                    # (TN, nh*T)

    # Per-head softmax (f32 math; reciprocal on the otherwise-idle EUP slot).
    parts = []
    for h in range(n_heads):
        sh = s[:, h * t_len:(h + 1) * t_len]                           # (TN, T)
        sh = sh - jnp.max(sh, axis=-1, keepdims=True)
        eh = jnp.exp(sh)
        inv = pl.reciprocal(jnp.sum(eh, axis=-1, keepdims=True), approx=True)
        parts.append(eh * inv)
    p = jnp.concatenate(parts, axis=-1).astype(x.dtype)                # (TN, nh*T)

    # Packed PV: block-diagonal V lands heads already concatenated -> (TN, H).
    o = jnp.dot(p, vbd_ref[...], preferred_element_type=jnp.float32)

    # Fused MHA out_proj ∘ module out_proj.
    out = jnp.dot(o.astype(x.dtype), woc_ref[...],
                  preferred_element_type=jnp.float32) + boc_ref[...]   # (TN, C)
    out_ref[...] = out.astype(out_ref.dtype)


def _full_spec(shape):
    zeros = (0,) * len(shape)
    return pl.BlockSpec(shape, lambda i, _z=zeros: _z)


def _round_up(x, m):
    return (x + m - 1) // m * m


def cross_attention_fusion(voxel_features, text_features, params, *, tile_rows=512):
    """voxel_features: (B, C, X, Y, Z); text_features: (T, text_dim)."""
    B, C, X, Y, Z = voxel_features.shape
    N = X * Y * Z
    T, Dt = text_features.shape
    H = HIDDEN_DIM
    scale = 1.0 / math.sqrt(HEAD_DIM)

    with jax.default_matmul_precision("highest"):
        # ---- algebraic fusion of chained linear layers (done once, outside kernel) ----
        Wvp, bvp = params['voxel_proj_w'], params['voxel_proj_b']
        Wtp, btp = params['text_proj_w'], params['text_proj_b']
        Wq, bq = params['wq'], params['bq']
        Wk, bk = params['wk'], params['bk']
        Wv, bv = params['wv'], params['bv']
        Wo, bo = params['attn_out_w'], params['attn_out_b']
        Wfp, bfp = params['out_proj_w'], params['out_proj_b']

        # q = ((x @ Wvp.T + bvp) @ Wq.T + bq) * scale  ==  x @ W_qc + b_qc
        W_qc = (Wvp.T @ Wq.T) * scale                  # (C, H)
        b_qc = ((bvp @ Wq.T) + bq) * scale             # (H,)

        # Shared text path (independent of batch / voxel rows) computed once.
        t_in = text_features @ Wtp.T + btp             # (T, H)
        k = t_in @ Wk.T + bk                           # (T, H)
        v = t_in @ Wv.T + bv                           # (T, H)

        # out = (attn @ Wo.T + bo) @ Wfp.T + bfp  ==  attn @ W_oc + b_oc
        W_oc = Wo.T @ Wfp.T                            # (H, C)
        b_oc = bo @ Wfp.T + bfp                        # (C,)

        # Block-diagonal packed K^T (H, nh*T) and V (nh*T, H).
        k_blocks = [k[:, h * HEAD_DIM:(h + 1) * HEAD_DIM].T for h in range(N_HEADS)]
        v_blocks = [v[:, h * HEAD_DIM:(h + 1) * HEAD_DIM] for h in range(N_HEADS)]
        kbd = jax.scipy.linalg.block_diag(*k_blocks)   # (H, nh*T)
        vbd = jax.scipy.linalg.block_diag(*v_blocks)   # (nh*T, H)

    # glue: (B, C, X, Y, Z) -> (B*N, C); batch folds into the row axis (K/V shared).
    x_rows = voxel_features.reshape(B, C, N).transpose(0, 2, 1).reshape(B * N, C)

    M = B * N
    TN = tile_rows if M > tile_rows else max(8, _round_up(M, 8))
    M_pad = _round_up(M, TN)
    if M_pad != M:
        x_rows = jnp.pad(x_rows, ((0, M_pad - M), (0, 0)))

    bf16 = jnp.bfloat16
    f32 = jnp.float32
    NHT = N_HEADS * T

    kernel = functools.partial(_cross_attn_kernel, n_heads=N_HEADS, t_len=T)

    out_rows = pl.pallas_call(
        kernel,
        out_shape=jax.ShapeDtypeStruct((M_pad, C), voxel_features.dtype),
        grid=(M_pad // TN,),
        in_specs=[
            pl.BlockSpec((TN, C), lambda i: (i, 0)),   # voxel rows (tiled per step)
            _full_spec((C, H)), _full_spec((1, H)),    # fused q weight / bias
            _full_spec((H, NHT)),                      # block-diagonal K^T
            _full_spec((NHT, H)),                      # block-diagonal V
            _full_spec((H, C)), _full_spec((1, C)),    # fused out weight / bias
        ],
        out_specs=pl.BlockSpec((TN, C), lambda i: (i, 0)),
        compiler_params=pltpu.CompilerParams(dimension_semantics=("parallel",)),
    )(x_rows.astype(bf16),
      W_qc.astype(bf16), b_qc[None, :].astype(f32),
      kbd.astype(bf16), vbd.astype(bf16),
      W_oc.astype(bf16), b_oc[None, :].astype(f32))

    out_rows = out_rows[:M]
    # glue: (B*N, C) -> (B, C, X, Y, Z)
    return out_rows.reshape(B, N, C).transpose(0, 2, 1).reshape(B, C, X, Y, Z)


def init_params(key):
    ks = jax.random.split(key, 14)

    def lin(kw, kb, out_dim, in_dim):
        w = jax.random.normal(kw, (out_dim, in_dim), jnp.float32) / math.sqrt(in_dim)
        b = jax.random.normal(kb, (out_dim,), jnp.float32) * 0.01
        return w, b

    p = {}
    p['voxel_proj_w'], p['voxel_proj_b'] = lin(ks[0], ks[1], HIDDEN_DIM, VOXEL_DIM)
    p['text_proj_w'], p['text_proj_b'] = lin(ks[2], ks[3], HIDDEN_DIM, TEXT_DIM)
    # nn.MultiheadAttention in_proj_weight (3H, H) split into q/k/v.
    p['wq'], p['bq'] = lin(ks[4], ks[5], HIDDEN_DIM, HIDDEN_DIM)
    p['wk'], p['bk'] = lin(ks[6], ks[7], HIDDEN_DIM, HIDDEN_DIM)
    p['wv'], p['bv'] = lin(ks[8], ks[9], HIDDEN_DIM, HIDDEN_DIM)
    p['attn_out_w'], p['attn_out_b'] = lin(ks[10], ks[11], HIDDEN_DIM, HIDDEN_DIM)
    p['out_proj_w'], p['out_proj_b'] = lin(ks[12], ks[13], VOXEL_DIM, HIDDEN_DIM)
    return p


def reference(voxel, text, p):
    """Pure-JAX replica of the PyTorch forward for correctness checking."""
    with jax.default_matmul_precision("highest"):
        B, C, X, Y, Z = voxel.shape
        N = X * Y * Z
        T, Dt = text.shape
        v = voxel.reshape(B, C, N).transpose(2, 0, 1)                     # (N, B, C)
        t = jnp.broadcast_to(text[:, None, :], (T, B, Dt))                # (T, B, Dt)
        q_in = v @ p['voxel_proj_w'].T + p['voxel_proj_b']                # (N, B, H)
        t_in = t @ p['text_proj_w'].T + p['text_proj_b']                  # (T, B, H)
        q = q_in @ p['wq'].T + p['bq']
        k = t_in @ p['wk'].T + p['bk']
        val = t_in @ p['wv'].T + p['bv']

        def to_heads(x):
            L = x.shape[0]
            return x.reshape(L, B, N_HEADS, HEAD_DIM).transpose(1, 2, 0, 3)

        qh = to_heads(q) / math.sqrt(HEAD_DIM)
        kh = to_heads(k)
        vh = to_heads(val)
        s = jnp.einsum('bhqd,bhkd->bhqk', qh, kh)
        attn = jax.nn.softmax(s, axis=-1)
        o = jnp.einsum('bhqk,bhkd->bhqd', attn, vh)                       # (B, nh, N, hd)
        o = o.transpose(2, 0, 1, 3).reshape(N, B, HIDDEN_DIM)             # (N, B, H)
        o = o @ p['attn_out_w'].T + p['attn_out_b']
        fused = o @ p['out_proj_w'].T + p['out_proj_b']                   # (N, B, C)
        return fused.transpose(1, 2, 0).reshape(B, C, X, Y, Z)


if __name__ == "__main__":
    key = jax.random.PRNGKey(0)
    kp, kv, kt = jax.random.split(key, 3)
    params = init_params(kp)

    B, X, Y, Z = 2, 4, 4, 4          # N = X*Y*Z = 64 query positions -> 128 total rows
    T = 8                            # text sequence length

    voxel = jax.random.normal(kv, (B, VOXEL_DIM, X, Y, Z), jnp.float32)
    text = jax.random.normal(kt, (T, TEXT_DIM), jnp.float32)

    out = cross_attention_fusion(voxel, text, params)
    out = jax.block_until_ready(out)

    ref = reference(voxel, text, params)
    np.testing.assert_allclose(np.asarray(out), np.asarray(ref), rtol=5e-2, atol=5e-2)

    print("KERNEL_OK")
</pallas_src>

<mosaic_0001>
module attributes {stable_mosaic.version = 11 : i64} {
  func.func @_cross_attn_kernel(%arg0: i32, %arg1: memref<128x128xbf16, #tpu.memory_space<vmem>>, %arg2: memref<128x128xbf16, #tpu.memory_space<vmem>>, %arg3: memref<1x128xf32, #tpu.memory_space<vmem>>, %arg4: memref<128x32xbf16, #tpu.memory_space<vmem>>, %arg5: memref<32x128xbf16, #tpu.memory_space<vmem>>, %arg6: memref<128x128xbf16, #tpu.memory_space<vmem>>, %arg7: memref<1x128xf32, #tpu.memory_space<vmem>>, %arg8: memref<128x128xf32, #tpu.memory_space<vmem>>) attributes {dimension_semantics = [#tpu.dimension_semantics<parallel>], iteration_bounds = array<i64: 1>, scalar_prefetch = 0 : i64, scratch_operands = 0 : i64, tpu.core_type = #tpu.core_type<tc>, window_params = [{transform_indices = @transform_0, window_bounds = array<i64: 128, 128>}, {pipeline_mode = #tpu.pipeline_mode<synchronous>, transform_indices = @transform_1, window_bounds = array<i64: 128, 128>}, {pipeline_mode = #tpu.pipeline_mode<synchronous>, transform_indices = @transform_2, window_bounds = array<i64: 1, 128>}, {pipeline_mode = #tpu.pipeline_mode<synchronous>, transform_indices = @transform_3, window_bounds = array<i64: 128, 32>}, {pipeline_mode = #tpu.pipeline_mode<synchronous>, transform_indices = @transform_4, window_bounds = array<i64: 32, 128>}, {pipeline_mode = #tpu.pipeline_mode<synchronous>, transform_indices = @transform_5, window_bounds = array<i64: 128, 128>}, {pipeline_mode = #tpu.pipeline_mode<synchronous>, transform_indices = @transform_6, window_bounds = array<i64: 1, 128>}, {transform_indices = @transform_7, window_bounds = array<i64: 128, 128>}]} {
    %c0 = arith.constant 0 : index
    %c0_0 = arith.constant 0 : index
    %0 = vector.load %arg1[%c0, %c0_0] : memref<128x128xbf16, #tpu.memory_space<vmem>>, vector<128x128xbf16>
    %c0_1 = arith.constant 0 : index
    %c0_2 = arith.constant 0 : index
    %1 = vector.load %arg2[%c0_1, %c0_2] : memref<128x128xbf16, #tpu.memory_space<vmem>>, vector<128x128xbf16>
    %cst = arith.constant dense<0.000000e+00> : vector<128x128xf32>
    %2 = tpu.matmul %0, %1, %cst {dimension_numbers = #tpu.dot_dimension_numbers<[1], [0], [0], [1], [0, 0, 1, 1], [], []>} : vector<128x128xbf16>, vector<128x128xbf16>, vector<128x128xf32> -> vector<128x128xf32>
    %c0_3 = arith.constant 0 : index
    %c0_4 = arith.constant 0 : index
    %3 = vector.load %arg3[%c0_3, %c0_4] : memref<1x128xf32, #tpu.memory_space<vmem>>, vector<1x128xf32>
    %4 = vector.broadcast %3 : vector<1x128xf32> to vector<128x128xf32>
    %5 = arith.addf %2, %4 : vector<128x128xf32>
    %6 = arith.truncf %5 : vector<128x128xf32> to vector<128x128xbf16>
    %c0_5 = arith.constant 0 : index
    %c0_6 = arith.constant 0 : index
    %7 = vector.load %arg4[%c0_5, %c0_6] : memref<128x32xbf16, #tpu.memory_space<vmem>>, vector<128x32xbf16>
    %cst_7 = arith.constant dense<0.000000e+00> : vector<128x32xf32>
    %8 = tpu.matmul %6, %7, %cst_7 {dimension_numbers = #tpu.dot_dimension_numbers<[1], [0], [0], [1], [0, 0, 1, 1], [], []>} : vector<128x128xbf16>, vector<128x32xbf16>, vector<128x32xf32> -> vector<128x32xf32>
    %9 = vector.extract_strided_slice %8 {offsets = [0, 0], sizes = [128, 8], strides = [1, 1]} : vector<128x32xf32> to vector<128x8xf32>
    %cst_8 = arith.constant dense<0xFF800000> : vector<128xf32>
    %10 = vector.multi_reduction <maximumf>, %9, %cst_8 [1] : vector<128x8xf32> to vector<128xf32>
    %11 = vector.shape_cast %10 : vector<128xf32> to vector<128x1xf32>
    %12 = vector.broadcast %11 : vector<128x1xf32> to vector<128x8xf32>
    %13 = arith.subf %9, %12 : vector<128x8xf32>
    %14 = math.exp %13 : vector<128x8xf32>
    %cst_9 = arith.constant dense<0.000000e+00> : vector<128xf32>
    %15 = vector.multi_reduction <add>, %14, %cst_9 [1] : vector<128x8xf32> to vector<128xf32>
    %16 = vector.shape_cast %15 : vector<128xf32> to vector<128x1xf32>
    %17 = tpu.reciprocal %16 {approx = true} : vector<128x1xf32> -> vector<128x1xf32>
    %18 = vector.broadcast %17 : vector<128x1xf32> to vector<128x8xf32>
    %19 = arith.mulf %14, %18 : vector<128x8xf32>
    %20 = vector.extract_strided_slice %8 {offsets = [0, 8], sizes = [128, 8], strides = [1, 1]} : vector<128x32xf32> to vector<128x8xf32>
    %cst_10 = arith.constant dense<0xFF800000> : vector<128xf32>
    %21 = vector.multi_reduction <maximumf>, %20, %cst_10 [1] : vector<128x8xf32> to vector<128xf32>
    %22 = vector.shape_cast %21 : vector<128xf32> to vector<128x1xf32>
    %23 = vector.broadcast %22 : vector<128x1xf32> to vector<128x8xf32>
    %24 = arith.subf %20, %23 : vector<128x8xf32>
    %25 = math.exp %24 : vector<128x8xf32>
    %cst_11 = arith.constant dense<0.000000e+00> : vector<128xf32>
    %26 = vector.multi_reduction <add>, %25, %cst_11 [1] : vector<128x8xf32> to vector<128xf32>
    %27 = vector.shape_cast %26 : vector<128xf32> to vector<128x1xf32>
    %28 = tpu.reciprocal %27 {approx = true} : vector<128x1xf32> -> vector<128x1xf32>
    %29 = vector.broadcast %28 : vector<128x1xf32> to vector<128x8xf32>
    %30 = arith.mulf %25, %29 : vector<128x8xf32>
    %31 = vector.extract_strided_slice %8 {offsets = [0, 16], sizes = [128, 8], strides = [1, 1]} : vector<128x32xf32> to vector<128x8xf32>
    %cst_12 = arith.constant dense<0xFF800000> : vector<128xf32>
    %32 = vector.multi_reduction <maximumf>, %31, %cst_12 [1] : vector<128x8xf32> to vector<128xf32>
    %33 = vector.shape_cast %32 : vector<128xf32> to vector<128x1xf32>
    %34 = vector.broadcast %33 : vector<128x1xf32> to vector<128x8xf32>
    %35 = arith.subf %31, %34 : vector<128x8xf32>
    %36 = math.exp %35 : vector<128x8xf32>
    %cst_13 = arith.constant dense<0.000000e+00> : vector<128xf32>
    %37 = vector.multi_reduction <add>, %36, %cst_13 [1] : vector<128x8xf32> to vector<128xf32>
    %38 = vector.shape_cast %37 : vector<128xf32> to vector<128x1xf32>
    %39 = tpu.reciprocal %38 {approx = true} : vector<128x1xf32> -> vector<128x1xf32>
    %40 = vector.broadcast %39 : vector<128x1xf32> to vector<128x8xf32>
    %41 = arith.mulf %36, %40 : vector<128x8xf32>
    %42 = vector.extract_strided_slice %8 {offsets = [0, 24], sizes = [128, 8], strides = [1, 1]} : vector<128x32xf32> to vector<128x8xf32>
    %cst_14 = arith.constant dense<0xFF800000> : vector<128xf32>
    %43 = vector.multi_reduction <maximumf>, %42, %cst_14 [1] : vector<128x8xf32> to vector<128xf32>
    %44 = vector.shape_cast %43 : vector<128xf32> to vector<128x1xf32>
    %45 = vector.broadcast %44 : vector<128x1xf32> to vector<128x8xf32>
    %46 = arith.subf %42, %45 : vector<128x8xf32>
    %47 = math.exp %46 : vector<128x8xf32>
    %cst_15 = arith.constant dense<0.000000e+00> : vector<128xf32>
    %48 = vector.multi_reduction <add>, %47, %cst_15 [1] : vector<128x8xf32> to vector<128xf32>
    %49 = vector.shape_cast %48 : vector<128xf32> to vector<128x1xf32>
    %50 = tpu.reciprocal %49 {approx = true} : vector<128x1xf32> -> vector<128x1xf32>
    %51 = vector.broadcast %50 : vector<128x1xf32> to vector<128x8xf32>
    %52 = arith.mulf %47, %51 : vector<128x8xf32>
    %53 = tpu.concatenate %19, %30, %41, %52 in 1 : vector<128x8xf32>, vector<128x8xf32>, vector<128x8xf32>, vector<128x8xf32> -> vector<128x32xf32>
    %54 = arith.truncf %53 : vector<128x32xf32> to vector<128x32xbf16>
    %c0_16 = arith.constant 0 : index
    %c0_17 = arith.constant 0 : index
    %55 = vector.load %arg5[%c0_16, %c0_17] : memref<32x128xbf16, #tpu.memory_space<vmem>>, vector<32x128xbf16>
    %cst_18 = arith.constant dense<0.000000e+00> : vector<128x128xf32>
    %56 = tpu.matmul %54, %55, %cst_18 {dimension_numbers = #tpu.dot_dimension_numbers<[1], [0], [0], [1], [0, 0, 1, 1], [], []>} : vector<128x32xbf16>, vector<32x128xbf16>, vector<128x128xf32> -> vector<128x128xf32>
    %57 = arith.truncf %56 : vector<128x128xf32> to vector<128x128xbf16>
    %c0_19 = arith.constant 0 : index
    %c0_20 = arith.constant 0 : index
    %58 = vector.load %arg6[%c0_19, %c0_20] : memref<128x128xbf16, #tpu.memory_space<vmem>>, vector<128x128xbf16>
    %cst_21 = arith.constant dense<0.000000e+00> : vector<128x128xf32>
    %59 = tpu.matmul %57, %58, %cst_21 {dimension_numbers = #tpu.dot_dimension_numbers<[1], [0], [0], [1], [0, 0, 1, 1], [], []>} : vector<128x128xbf16>, vector<128x128xbf16>, vector<128x128xf32> -> vector<128x128xf32>
    %c0_22 = arith.constant 0 : index
    %c0_23 = arith.constant 0 : index
    %60 = vector.load %arg7[%c0_22, %c0_23] : memref<1x128xf32, #tpu.memory_space<vmem>>, vector<1x128xf32>
    %61 = vector.broadcast %60 : vector<1x128xf32> to vector<128x128xf32>
    %62 = arith.addf %59, %61 : vector<128x128xf32>
    %c0_24 = arith.constant 0 : index
    %c0_25 = arith.constant 0 : index
    %63 = vector.load %arg8[%c0_24, %c0_25] : memref<128x128xf32, #tpu.memory_space<vmem>>, vector<128x128xf32>
    tpu.vector_store %arg8[%c0_24, %c0_25], %62 {strides = array<i32>} : memref<128x128xf32, #tpu.memory_space<vmem>>, vector<128x128xf32>,
    return
  }
  func.func @transform_0(%arg0: i32) -> (i32, i32) {
    %c0_i32 = arith.constant 0 : i32
    %c0_i32_0 = arith.constant 0 : i32
    return %arg0, %c0_i32 : i32, i32
  }
  func.func @transform_1(%arg0: i32) -> (i32, i32) {
    %c0_i32 = arith.constant 0 : i32
    %c0_i32_0 = arith.constant 0 : i32
    %c0_i32_1 = arith.constant 0 : i32
    return %c0_i32, %c0_i32_0 : i32, i32
  }
  func.func @transform_2(%arg0: i32) -> (i32, i32) {
    %c0_i32 = arith.constant 0 : i32
    %c0_i32_0 = arith.constant 0 : i32
    %c0_i32_1 = arith.constant 0 : i32
    return %c0_i32, %c0_i32_0 : i32, i32
  }
  func.func @transform_3(%arg0: i32) -> (i32, i32) {
    %c0_i32 = arith.constant 0 : i32
    %c0_i32_0 = arith.constant 0 : i32
    %c0_i32_1 = arith.constant 0 : i32
    return %c0_i32, %c0_i32_0 : i32, i32
  }
  func.func @transform_4(%arg0: i32) -> (i32, i32) {
    %c0_i32 = arith.constant 0 : i32
    %c0_i32_0 = arith.constant 0 : i32
    %c0_i32_1 = arith.constant 0 : i32
    return %c0_i32, %c0_i32_0 : i32, i32
  }
  func.func @transform_5(%arg0: i32) -> (i32, i32) {
    %c0_i32 = arith.constant 0 : i32
    %c0_i32_0 = arith.constant 0 : i32
    %c0_i32_1 = arith.constant 0 : i32
    return %c0_i32, %c0_i32_0 : i32, i32
  }
  func.func @transform_6(%arg0: i32) -> (i32, i32) {
    %c0_i32 = arith.constant 0 : i32
    %c0_i32_0 = arith.constant 0 : i32
    %c0_i32_1 = arith.constant 0 : i32
    return %c0_i32, %c0_i32_0 : i32, i32
  }
  func.func @transform_7(%arg0: i32) -> (i32, i32) {
    %c0_i32 = arith.constant 0 : i32
    %c0_i32_0 = arith.constant 0 : i32
    return %arg0, %c0_i32 : i32, i32
  }
}

</mosaic_0001>

<llo_original>
// kernel: tpu_custom_call.1
$region0: #{tpu_custom_call.1}
  #allocation0 [shape = 'u32[]', space=smem, size = 0x4, offset = 0x4, fixed_abs, tag = 'smem constant byte address 0x4 - core index']
  #allocation1 [shape = 'u32[144,128]{1,0:T(1,128)}', space=vmem, size = 0x12000, scoped, tag = 'internal scratch']
  %s0 = inlined_call_operand.vmem [shape: bf16[128,128], index: 0, kind: input, shape index: {}]
  %s1 = inlined_call_operand.hbm [shape: bf16[128,128], index: 1, kind: input, shape index: {}]
  %s2 = inlined_call_operand.vmem [shape: f32[1,128], index: 2, kind: input, shape index: {}]
  %s3 = inlined_call_operand.vmem [shape: bf16[128,32], index: 3, kind: input, shape index: {}]
  %s4 = inlined_call_operand.vmem [shape: bf16[32,128], index: 4, kind: input, shape index: {}]
  %s5 = inlined_call_operand.hbm [shape: bf16[128,128], index: 5, kind: input, shape index: {}]
  %s6 = inlined_call_operand.vmem [shape: f32[1,128], index: 6, kind: input, shape index: {}]
  %s7 = inlined_call_operand.hbm [shape: f32[128,128], index: 7, kind: output, shape index: {}]
  %s8 = sld [smem:[#allocation0]]
  $region46: #{tpu_custom_call.1} parent=0
    _
  %s10 = ssub.s32 1, %s8
  %s11 = scalar_select 0, %s10, %s8
  $region1: #{tpu_custom_call.1} parent=0
    #allocation2 [shape = 'u8[32768]{0}', space=vmem, size = 0x8000, scoped, tag = 'input window, operand 1, single buffered']
    #allocation3 [shape = 's32[1]{0}', space=sflag, size = 0x4, scoped, tag = 'scoped memory for tpu_custom_call.1']
    #allocation4 [shape = 's32[1]{0}', space=sflag, size = 0x4, scoped, tag = 'scoped memory for tpu_custom_call.1']
    #allocation5 [shape = 'u8[32768]{0}', space=vmem, size = 0x8000, scoped, tag = 'input window, operand 5, single buffered']
    #allocation6 [shape = 's32[1]{0}', space=sflag, size = 0x4, scoped, tag = 'scoped memory for tpu_custom_call.1']
    #allocation7 [shape = 'u8[65536]{0}', space=vmem, size = 0x10000, scoped, tag = 'output window, operand 0, single buffered']
    %12 = vsyncpa [#allocation3], 0
    %13 = vsyncpa [#allocation6], 0
    %14 = vsyncpa [#allocation4], 0
    // Predicated region
    $region2: #{tpu_custom_call.1} parent=1 // pred_check
      _
    $region3: #{tpu_custom_call.1} parent=1 // pred_check_branch
      %16 = sbr.rel (0) target = $region5
    $region4: #{tpu_custom_call.1} parent=1 // pred_region
      _
    $region5: #{tpu_custom_call.1} parent=1 // pred_fallthru
      _
    // Predicated region
    $region6: #{tpu_custom_call.1} parent=1 // pred_check
      _
    $region7: #{tpu_custom_call.1} parent=1 // pred_check_branch
      %18 = sbr.rel (0) target = $region9
    $region8: #{tpu_custom_call.1} parent=1 // pred_region
      %s20 = ssub.s32 1024, 1024
      %21 = vsyncadd [#allocation3], %s20
      %s22 = sshll.u32 [#allocation2], 4
      %s23 = int_to_ptr.vmem [resolvable:$true] %s22
      %28 = dma.hbm_to_vmem [thread:$0]  %s1, 1024, %s23, [#allocation3], 64, 64, 4
    $region9: #{tpu_custom_call.1} parent=1 // pred_fallthru
      _
    // Predicated region
    $region10: #{tpu_custom_call.1} parent=1 // pred_check
      _
    $region11: #{tpu_custom_call.1} parent=1 // pred_check_branch
      %30 = sbr.rel (0) target = $region13
    $region12: #{tpu_custom_call.1} parent=1 // pred_region
      _
    $region13: #{tpu_custom_call.1} parent=1 // pred_fallthru
      _
    // Predicated region
    $region14: #{tpu_custom_call.1} parent=1 // pred_check
      _
    $region15: #{tpu_custom_call.1} parent=1 // pred_check_branch
      %32 = sbr.rel (0) target = $region17
    $region16: #{tpu_custom_call.1} parent=1 // pred_region
      _
    $region17: #{tpu_custom_call.1} parent=1 // pred_fallthru
      _
    // Predicated region
    $region18: #{tpu_custom_call.1} parent=1 // pred_check
      _
    $region19: #{tpu_custom_call.1} parent=1 // pred_check_branch
      %34 = sbr.rel (0) target = $region21
    $region20: #{tpu_custom_call.1} parent=1 // pred_region
      _
    $region21: #{tpu_custom_call.1} parent=1 // pred_fallthru
      _
    // Predicated region
    $region22: #{tpu_custom_call.1} parent=1 // pred_check
      _
    $region23: #{tpu_custom_call.1} parent=1 // pred_check_branch
      %36 = sbr.rel (0) target = $region25
    $region24: #{tpu_custom_call.1} parent=1 // pred_region
      %s38 = ssub.s32 1024, 1024
      %39 = vsyncadd [#allocation6], %s38
      %s40 = sshll.u32 [#allocation5], 4
      %s41 = int_to_ptr.vmem [resolvable:$true] %s40
      %46 = dma.hbm_to_vmem [thread:$0]  %s5, 1024, %s41, [#allocation6], 64, 64, 4
    $region25: #{tpu_custom_call.1} parent=1 // pred_fallthru
      _
    // Predicated region
    $region26: #{tpu_custom_call.1} parent=1 // pred_check
      _
    $region27: #{tpu_custom_call.1} parent=1 // pred_check_branch
      %48 = sbr.rel (0) target = $region29
    $region28: #{tpu_custom_call.1} parent=1 // pred_region
      _
    $region29: #{tpu_custom_call.1} parent=1 // pred_fallthru
      _
    // Predicated region
    $region30: #{tpu_custom_call.1} parent=1 // pred_check
      _
    $region31: #{tpu_custom_call.1} parent=1 // pred_check_branch
      %50 = sbr.rel (0) target = $region33
    $region32: #{tpu_custom_call.1} parent=1 // pred_region
      %51 = dma.done [#allocation3], 1024
    $region33: #{tpu_custom_call.1} parent=1 // pred_fallthru
      _
    // Predicated region
    $region34: #{tpu_custom_call.1} parent=1 // pred_check
      _
    $region35: #{tpu_custom_call.1} parent=1 // pred_check_branch
      %53 = sbr.rel (0) target = $region37
    $region36: #{tpu_custom_call.1} parent=1 // pred_region
      %54 = dma.done [#allocation6], 1024
    $region37: #{tpu_custom_call.1} parent=1 // pred_fallthru
      _
    %v56 = vld [vmem:[%s0] sm:$0xf]
    %v57 = vld [vmem:[%s0 + $0x4] sm:$0xf]
    %v58 = vld [vmem:[%s0 + $0x8] sm:$0xf]
    %v59 = vld [vmem:[%s0 + $0xc] sm:$0xf]
    %v60 = vld [vmem:[%s0 + $0x10] sm:$0xf]
    %v61 = vld [vmem:[%s0 + $0x14] sm:$0xf]
    %v62 = vld [vmem:[%s0 + $0x18] sm:$0xf]
    %v63 = vld [vmem:[%s0 + $0x1c] sm:$0xf]
    %v64 = vld [vmem:[%s0 + $0x20] sm:$0xf]
    %v65 = vld [vmem:[%s0 + $0x24] sm:$0xf]
    %v66 = vld [vmem:[%s0 + $0x28] sm:$0xf]
    %v67 = vld [vmem:[%s0 + $0x2c] sm:$0xf]
    %v68 = vld [vmem:[%s0 + $0x30] sm:$0xf]
    %v69 = vld [vmem:[%s0 + $0x34] sm:$0xf]
    %v70 = vld [vmem:[%s0 + $0x38] sm:$0xf]
    %v71 = vld [vmem:[%s0 + $0x3c] sm:$0xf]
    %v72 = vld [vmem:[#allocation2] sm:$0xf]
    %v73 = vld [vmem:[#allocation2 + $0x4] sm:$0xf]
    %v74 = vld [vmem:[#allocation2 + $0x8] sm:$0xf]
    %v75 = vld [vmem:[#allocation2 + $0xc] sm:$0xf]
    %v76 = vld [vmem:[#allocation2 + $0x10] sm:$0xf]
    %v77 = vld [vmem:[#allocation2 + $0x14] sm:$0xf]
    %v78 = vld [vmem:[#allocation2 + $0x18] sm:$0xf]
    %v79 = vld [vmem:[#allocation2 + $0x1c] sm:$0xf]
    %v80 = vld [vmem:[#allocation2 + $0x20] sm:$0xf]
    %v81 = vld [vmem:[#allocation2 + $0x24] sm:$0xf]
    %v82 = vld [vmem:[#allocation2 + $0x28] sm:$0xf]
    %v83 = vld [vmem:[#allocation2 + $0x2c] sm:$0xf]
    %v84 = vld [vmem:[#allocation2 + $0x30] sm:$0xf]
    %v85 = vld [vmem:[#allocation2 + $0x34] sm:$0xf]
    %v86 = vld [vmem:[#allocation2 + $0x38] sm:$0xf]
    %v87 = vld [vmem:[#allocation2 + $0x3c] sm:$0xf]
    %v88 = vld [vmem:[%s2] sm:$0x1]
    %v90 = vlaneseq
    %v91 = vshrl.u32 %v90, 7
    %v92 = vsub.s32 0, %v91
    %v93 = vrot.slane %v88, %v92
    %v111 = vunpack.c.l.b16 %v56
    %v112 = vunpack.c.l.b16 %v57
    %v113 = vunpack.c.l.b16 %v58
    %v114 = vunpack.c.l.b16 %v59
    %v115 = vunpack.c.l.b16 %v60
    %v116 = vunpack.c.l.b16 %v61
    %v117 = vunpack.c.l.b16 %v62
    %v118 = vunpack.c.l.b16 %v63
    %v119 = vunpack.c.l.b16 %v64
    %v120 = vunpack.c.l.b16 %v65
    %v121 = vunpack.c.l.b16 %v66
    %v122 = vunpack.c.l.b16 %v67
    %v123 = vunpack.c.l.b16 %v68
    %v124 = vunpack.c.l.b16 %v69
    %v125 = vunpack.c.l.b16 %v70
    %v126 = vunpack.c.l.b16 %v71
    %v127 = vpack.c.b16 %v112, %v111
    %v128 = vpack.c.b16 %v114, %v113
    %v129 = vpack.c.b16 %v116, %v115
    %v130 = vpack.c.b16 %v118, %v117
    %v131 = vpack.c.b16 %v120, %v119
    %v132 = vpack.c.b16 %v122, %v121
    %v133 = vpack.c.b16 %v124, %v123
    %v134 = vpack.c.b16 %v126, %v125
    %v159 = vunpack.c.l.b16 %v72
    %v160 = vunpack.c.l.b16 %v73
    %v161 = vunpack.c.l.b16 %v74
    %v162 = vunpack.c.l.b16 %v75
    %v163 = vunpack.c.l.b16 %v76
    %v164 = vunpack.c.l.b16 %v77
    %v165 = vunpack.c.l.b16 %v78
    %v166 = vunpack.c.l.b16 %v79
    %v167 = vunpack.c.l.b16 %v80
    %v168 = vunpack.c.l.b16 %v81
    %v169 = vunpack.c.l.b16 %v82
    %v170 = vunpack.c.l.b16 %v83
    %v171 = vunpack.c.l.b16 %v84
    %v172 = vunpack.c.l.b16 %v85
    %v173 = vunpack.c.l.b16 %v86
    %v174 = vunpack.c.l.b16 %v87
    %v175 = vpack.c.b16 %v160, %v159
    %v176 = vpack.c.b16 %v162, %v161
    %v177 = vpack.c.b16 %v164, %v163
    %v178 = vpack.c.b16 %v166, %v165
    %v179 = vpack.c.b16 %v168, %v167
    %v180 = vpack.c.b16 %v170, %v169
    %v181 = vpack.c.b16 %v172, %v171
    %v182 = vpack.c.b16 %v174, %v173
    %191 = vmatprep.subr.bf16.mxu0 0
    %192 = vmatpush1.bf16.msra.mxu0 %v182
    %193 = vmatprep.subr.bf16.mxu0 0
    %194 = vmatpush1.bf16.msra.mxu0 %v181
    %195 = vmatprep.subr.bf16.mxu0 0
    %196 = vmatpush1.bf16.msra.mxu0 %v180
    %197 = vmatprep.subr.bf16.mxu0 0
    %198 = vmatpush1.bf16.msra.mxu0 %v179
    %199 = vmatprep.subr.bf16.mxu0 0
    %200 = vmatpush1.bf16.msra.mxu0 %v178
    %201 = vmatprep.subr.bf16.mxu0 0
    %202 = vmatpush1.bf16.msra.mxu0 %v177
    %203 = vmatprep.subr.bf16.mxu0 0
    %204 = vmatpush1.bf16.msra.mxu0 %v176
    %205 = vmatprep.subr.bf16.mxu0 0
    %206 = vmatpush1.bf16.msra.mxu0 %v175
    %207 = vmatprep.subr.bf16.mxu0 0
    %208 = vmatpush2.bf16.msra.mxu0 0
    %209 = vmatprep.subr.bf16.mxu0 0
    %210 = vmatpush2.bf16.msra.mxu0 0
    %211 = vmatprep.subr.bf16.mxu0 0
    %212 = vmatpush2.bf16.msra.mxu0 0
    %213 = vmatprep.subr.bf16.mxu0 0
    %214 = vmatpush2.bf16.msra.mxu0 0
    %215 = vmatprep.subr.bf16.mxu0 0
    %216 = vmatpush2.bf16.msra.mxu0 0
    %217 = vmatprep.subr.bf16.mxu0 0
    %218 = vmatpush2.bf16.msra.mxu0 0
    %219 = vmatprep.subr.bf16.mxu0 0
    %220 = vmatpush2.bf16.msra.mxu0 0
    %221 = vmatprep.subr.bf16.mxu0 0
    %222 = vmatpush2.bf16.msra.mxu0 0
    %223 = vmatprep.mubr.bf16.mxu0 0
    %224 = vmatmul.mubr.bf16.gmra.mxu0 %v127
    %v225 = vpop.f32.mrf.mxu0
    %v226 = vadd.f32 %v93, %v225
    %v227 = vpop.f32.mrf.mxu0
    %v228 = vpop.f32.mrf.mxu0
    %v229 = vadd.f32 %v93, %v228
    %v230 = vpop.f32.mrf.mxu0
    %231 = vmatprep.mubr.bf16.mxu0 0
    %232 = vmatmul.mubr.bf16.gmra.mxu0 %v128
    %v233 = vpop.f32.mrf.mxu0
    %v234 = vadd.f32 %v93, %v233
    %v235 = vpop.f32.mrf.mxu0
    %v236 = vpop.f32.mrf.mxu0
    %v237 = vadd.f32 %v93, %v236
    %v238 = vpop.f32.mrf.mxu0
    %239 = vmatprep.mubr.bf16.mxu0 0
    %240 = vmatmul.mubr.bf16.gmra.mxu0 %v129
    %v241 = vpop.f32.mrf.mxu0
    %v242 = vadd.f32 %v93, %v241
    %v243 = vpop.f32.mrf.mxu0
    %v244 = vpop.f32.mrf.mxu0
    %v245 = vadd.f32 %v93, %v244
    %v246 = vpop.f32.mrf.mxu0
    %247 = vmatprep.mubr.bf16.mxu0 0
    %248 = vmatmul.mubr.bf16.gmra.mxu0 %v130
    %v249 = vpop.f32.mrf.mxu0
    %v250 = vadd.f32 %v93, %v249
    %v251 = vpop.f32.mrf.mxu0
    %v252 = vpop.f32.mrf.mxu0
    %v253 = vadd.f32 %v93, %v252
    %v254 = vpop.f32.mrf.mxu0
    %255 = vmatprep.mubr.bf16.mxu0 0
    %256 = vmatmul.mubr.bf16.gmra.mxu0 %v131
    %v257 = vpop.f32.mrf.mxu0
    %v258 = vadd.f32 %v93, %v257
    %v259 = vpop.f32.mrf.mxu0
    %v260 = vpop.f32.mrf.mxu0
    %v261 = vadd.f32 %v93, %v260
    %v262 = vpop.f32.mrf.mxu0
    %263 = vmatprep.mubr.bf16.mxu0 0
    %264 = vmatmul.mubr.bf16.gmra.mxu0 %v132
    %v265 = vpop.f32.mrf.mxu0
    %v266 = vadd.f32 %v93, %v265
    %v267 = vpop.f32.mrf.mxu0
    %v268 = vpop.f32.mrf.mxu0
    %v269 = vadd.f32 %v93, %v268
    %v270 = vpop.f32.mrf.mxu0
    %271 = vmatprep.mubr.bf16.mxu0 0
    %272 = vmatmul.mubr.bf16.gmra.mxu0 %v133
    %v273 = vpop.f32.mrf.mxu0
    %v274 = vadd.f32 %v93, %v273
    %v275 = vpop.f32.mrf.mxu0
    %v276 = vpop.f32.mrf.mxu0
    %v277 = vadd.f32 %v93, %v276
    %v278 = vpop.f32.mrf.mxu0
    %279 = vmatprep.mubr.bf16.mxu0 0
    %280 = vmatmul.mubr.bf16.gmra.mxu0 %v134
    %v281 = vpop.f32.mrf.mxu0
    %v282 = vadd.f32 %v93, %v281
    %v283 = vpop.f32.mrf.mxu0
    %v284 = vpop.f32.mrf.mxu0
    %v285 = vadd.f32 %v93, %v284
    %v286 = vpop.f32.mrf.mxu0
    %287 = vdwg.mxu0
    %v288 = vpack.c.bf16 %v229, %v226
    %v289 = vpack.c.bf16 %v237, %v234
    %v290 = vpack.c.bf16 %v245, %v242
    %v291 = vpack.c.bf16 %v253, %v250
    %v292 = vpack.c.bf16 %v261, %v258
    %v293 = vpack.c.bf16 %v269, %v266
    %v294 = vpack.c.bf16 %v277, %v274
    %v295 = vpack.c.bf16 %v285, %v282
    %v296 = vld [vmem:[%s3] sm:$0xf]
    %v297 = vld [vmem:[%s3 + $0x4] sm:$0xf]
    %v298 = vld [vmem:[%s3 + $0x8] sm:$0xf]
    %v299 = vld [vmem:[%s3 + $0xc] sm:$0xf]
    %v300 = vld [vmem:[%s3 + $0x10] sm:$0xf]
    %v301 = vld [vmem:[%s3 + $0x14] sm:$0xf]
    %v302 = vld [vmem:[%s3 + $0x18] sm:$0xf]
    %v303 = vld [vmem:[%s3 + $0x1c] sm:$0xf]
    %v304 = vld [vmem:[%s3 + $0x20] sm:$0xf]
    %v305 = vld [vmem:[%s3 + $0x24] sm:$0xf]
    %v306 = vld [vmem:[%s3 + $0x28] sm:$0xf]
    %v307 = vld [vmem:[%s3 + $0x2c] sm:$0xf]
    %v308 = vld [vmem:[%s3 + $0x30] sm:$0xf]
    %v309 = vld [vmem:[%s3 + $0x34] sm:$0xf]
    %v310 = vld [vmem:[%s3 + $0x38] sm:$0xf]
    %v311 = vld [vmem:[%s3 + $0x3c] sm:$0xf]
    %v328 = vunpack.c.l.b16 %v296
    %v329 = vunpack.c.l.b16 %v297
    %v330 = vunpack.c.l.b16 %v298
    %v331 = vunpack.c.l.b16 %v299
    %v332 = vunpack.c.l.b16 %v300
    %v333 = vunpack.c.l.b16 %v301
    %v334 = vunpack.c.l.b16 %v302
    %v335 = vunpack.c.l.b16 %v303
    %v336 = vunpack.c.l.b16 %v304
    %v337 = vunpack.c.l.b16 %v305
    %v338 = vunpack.c.l.b16 %v306
    %v339 = vunpack.c.l.b16 %v307
    %v340 = vunpack.c.l.b16 %v308
    %v341 = vunpack.c.l.b16 %v309
    %v342 = vunpack.c.l.b16 %v310
    %v343 = vunpack.c.l.b16 %v311
    %v344 = vpack.c.b16 %v329, %v328
    %v345 = vpack.c.b16 %v331, %v330
    %v346 = vpack.c.b16 %v333, %v332
    %v347 = vpack.c.b16 %v335, %v334
    %v348 = vpack.c.b16 %v337, %v336
    %v349 = vpack.c.b16 %v339, %v338
    %v350 = vpack.c.b16 %v341, %v340
    %v351 = vpack.c.b16 %v343, %v342
    %360 = vmatprep.subr.bf16.mxu0 0
    %361 = vmatpush1.bf16.msra.mxu0 %v351
    %362 = vmatprep.subr.bf16.mxu0 0
    %363 = vmatpush1.bf16.msra.mxu0 %v350
    %364 = vmatprep.subr.bf16.mxu0 0
    %365 = vmatpush1.bf16.msra.mxu0 %v349
    %366 = vmatprep.subr.bf16.mxu0 0
    %367 = vmatpush1.bf16.msra.mxu0 %v348
    %368 = vmatprep.subr.bf16.mxu0 0
    %369 = vmatpush1.bf16.msra.mxu0 %v347
    %370 = vmatprep.subr.bf16.mxu0 0
    %371 = vmatpush1.bf16.msra.mxu0 %v346
    %372 = vmatprep.subr.bf16.mxu0 0
    %373 = vmatpush1.bf16.msra.mxu0 %v345
    %374 = vmatprep.subr.bf16.mxu0 0
    %375 = vmatpush1.bf16.msra.mxu0 %v344
    %376 = vmatprep.subr.bf16.mxu0 0
    %377 = vmatpush2.bf16.msra.mxu0 0
    %378 = vmatprep.subr.bf16.mxu0 0
    %379 = vmatpush2.bf16.msra.mxu0 0
    %380 = vmatprep.subr.bf16.mxu0 0
    %381 = vmatpush2.bf16.msra.mxu0 0
    %382 = vmatprep.subr.bf16.mxu0 0
    %383 = vmatpush2.bf16.msra.mxu0 0
    %384 = vmatprep.subr.bf16.mxu0 0
    %385 = vmatpush2.bf16.msra.mxu0 0
    %386 = vmatprep.subr.bf16.mxu0 0
    %387 = vmatpush2.bf16.msra.mxu0 0
    %388 = vmatprep.subr.bf16.mxu0 0
    %389 = vmatpush2.bf16.msra.mxu0 0
    %390 = vmatprep.subr.bf16.mxu0 0
    %391 = vmatpush2.bf16.msra.mxu0 0
    %392 = vmatprep.mubr.bf16.mxu0 0
    %393 = vmatmul.mubr.bf16.gmra.mxu0 %v288
    %v394 = vpop.f32.mrf.mxu0
    %v395 = vadd.f32 0.0, %v394
    %v396 = vpop.f32.mrf.mxu0
    %v397 = vpop.f32.mrf.mxu0
    %v398 = vadd.f32 0.0, %v397
    %v399 = vpop.f32.mrf.mxu0
    %400 = vmatprep.mubr.bf16.mxu0 0
    %401 = vmatmul.mubr.bf16.gmra.mxu0 %v289
    %v402 = vpop.f32.mrf.mxu0
    %v403 = vadd.f32 0.0, %v402
    %v404 = vpop.f32.mrf.mxu0
    %v405 = vpop.f32.mrf.mxu0
    %v406 = vadd.f32 0.0, %v405
    %v407 = vpop.f32.mrf.mxu0
    %408 = vmatprep.mubr.bf16.mxu0 0
    %409 = vmatmul.mubr.bf16.gmra.mxu0 %v290
    %v410 = vpop.f32.mrf.mxu0
    %v411 = vadd.f32 0.0, %v410
    %v412 = vpop.f32.mrf.mxu0
    %v413 = vpop.f32.mrf.mxu0
    %v414 = vadd.f32 0.0, %v413
    %v415 = vpop.f32.mrf.mxu0
    %416 = vmatprep.mubr.bf16.mxu0 0
    %417 = vmatmul.mubr.bf16.gmra.mxu0 %v291
    %v418 = vpop.f32.mrf.mxu0
    %v419 = vadd.f32 0.0, %v418
    %v420 = vpop.f32.mrf.mxu0
    %v421 = vpop.f32.mrf.mxu0
    %v422 = vadd.f32 0.0, %v421
    %v423 = vpop.f32.mrf.mxu0
    %424 = vmatprep.mubr.bf16.mxu0 0
    %425 = vmatmul.mubr.bf16.gmra.mxu0 %v292
    %v426 = vpop.f32.mrf.mxu0
    %v427 = vadd.f32 0.0, %v426
    %v428 = vpop.f32.mrf.mxu0
    %v429 = vpop.f32.mrf.mxu0
    %v430 = vadd.f32 0.0, %v429
    %v431 = vpop.f32.mrf.mxu0
    %432 = vmatprep.mubr.bf16.mxu0 0
    %433 = vmatmul.mubr.bf16.gmra.mxu0 %v293
    %v434 = vpop.f32.mrf.mxu0
    %v435 = vadd.f32 0.0, %v434
    %v436 = vpop.f32.mrf.mxu0
    %v437 = vpop.f32.mrf.mxu0
    %v438 = vadd.f32 0.0, %v437
    %v439 = vpop.f32.mrf.mxu0
    %440 = vmatprep.mubr.bf16.mxu0 0
    %441 = vmatmul.mubr.bf16.gmra.mxu0 %v294
    %v442 = vpop.f32.mrf.mxu0
    %v443 = vadd.f32 0.0, %v442
    %v444 = vpop.f32.mrf.mxu0
    %v445 = vpop.f32.mrf.mxu0
    %v446 = vadd.f32 0.0, %v445
    %v447 = vpop.f32.mrf.mxu0
    %448 = vmatprep.mubr.bf16.mxu0 0
    %449 = vmatmul.mubr.bf16.gmra.mxu0 %v295
    %v450 = vpop.f32.mrf.mxu0
    %v451 = vadd.f32 0.0, %v450
    %v452 = vpop.f32.mrf.mxu0
    %v453 = vpop.f32.mrf.mxu0
    %v454 = vadd.f32 0.0, %v453
    %v455 = vpop.f32.mrf.mxu0
    %456 = vdwg.mxu0
    %vm457 = vcmask 64512
    %v458 = vsel %vm457, %v395, -inf
    %459 = vmax.xlane.f32.xlu0 %v458
    %v460 = vpop.xlane.xlu0 %459
    %v461 = vsel %vm457, %v398, -inf
    %462 = vmax.xlane.f32.xlu0 %v461
    %v463 = vpop.xlane.xlu0 %462
    %v464 = vsel %vm457, %v403, -inf
    %465 = vmax.xlane.f32.xlu0 %v464
    %v466 = vpop.xlane.xlu0 %465
    %v467 = vsel %vm457, %v406, -inf
    %468 = vmax.xlane.f32.xlu0 %v467
    %v469 = vpop.xlane.xlu0 %468
    %v470 = vsel %vm457, %v411, -inf
    %471 = vmax.xlane.f32.xlu0 %v470
    %v472 = vpop.xlane.xlu0 %471
    %v473 = vsel %vm457, %v414, -inf
    %474 = vmax.xlane.f32.xlu0 %v473
    %v475 = vpop.xlane.xlu0 %474
    %v476 = vsel %vm457, %v419, -inf
    %477 = vmax.xlane.f32.xlu0 %v476
    %v478 = vpop.xlane.xlu0 %477
    %v479 = vsel %vm457, %v422, -inf
    %480 = vmax.xlane.f32.xlu0 %v479
    %v481 = vpop.xlane.xlu0 %480
    %v482 = vsel %vm457, %v427, -inf
    %483 = vmax.xlane.f32.xlu0 %v482
    %v484 = vpop.xlane.xlu0 %483
    %v485 = vsel %vm457, %v430, -inf
    %486 = vmax.xlane.f32.xlu0 %v485
    %v487 = vpop.xlane.xlu0 %486
    %v488 = vsel %vm457, %v435, -inf
    %489 = vmax.xlane.f32.xlu0 %v488
    %v490 = vpop.xlane.xlu0 %489
    %v491 = vsel %vm457, %v438, -inf
    %492 = vmax.xlane.f32.xlu0 %v491
    %v493 = vpop.xlane.xlu0 %492
    %v494 = vsel %vm457, %v443, -inf
    %495 = vmax.xlane.f32.xlu0 %v494
    %v496 = vpop.xlane.xlu0 %495
    %v497 = vsel %vm457, %v446, -inf
    %498 = vmax.xlane.f32.xlu0 %v497
    %v499 = vpop.xlane.xlu0 %498
    %v500 = vsel %vm457, %v451, -inf
    %501 = vmax.xlane.f32.xlu0 %v500
    %v502 = vpop.xlane.xlu0 %501
    %v503 = vsel %vm457, %v454, -inf
    %504 = vmax.xlane.f32.xlu0 %v503
    %v505 = vpop.xlane.xlu0 %504
    %v506 = vsub.f32 %v395, %v460
    %v507 = vsub.f32 %v398, %v463
    %v508 = vsub.f32 %v403, %v466
    %v509 = vsub.f32 %v406, %v469
    %v510 = vsub.f32 %v411, %v472
    %v511 = vsub.f32 %v414, %v475
    %v512 = vsub.f32 %v419, %v478
    %v513 = vsub.f32 %v422, %v481
    %v514 = vsub.f32 %v427, %v484
    %v515 = vsub.f32 %v430, %v487
    %v516 = vsub.f32 %v435, %v490
    %v517 = vsub.f32 %v438, %v493
    %v518 = vsub.f32 %v443, %v496
    %v519 = vsub.f32 %v446, %v499
    %v520 = vsub.f32 %v451, %v502
    %v521 = vsub.f32 %v454, %v505
    %v522 = vmul.f32 %v506, 1.442695
    %v523 = vpow.pop %v522
    %v524 = vmul.f32 %v507, 1.442695
    %v525 = vpow.pop %v524
    %v526 = vmul.f32 %v508, 1.442695
    %v527 = vpow.pop %v526
    %v528 = vmul.f32 %v509, 1.442695
    %v529 = vpow.pop %v528
    %v530 = vmul.f32 %v510, 1.442695
    %v531 = vpow.pop %v530
    %v532 = vmul.f32 %v511, 1.442695
    %v533 = vpow.pop %v532
    %v534 = vmul.f32 %v512, 1.442695
    %v535 = vpow.pop %v534
    %v536 = vmul.f32 %v513, 1.442695
    %v537 = vpow.pop %v536
    %v538 = vmul.f32 %v514, 1.442695
    %v539 = vpow.pop %v538
    %v540 = vmul.f32 %v515, 1.442695
    %v541 = vpow.pop %v540
    %v542 = vmul.f32 %v516, 1.442695
    %v543 = vpow.pop %v542
    %v544 = vmul.f32 %v517, 1.442695
    %v545 = vpow.pop %v544
    %v546 = vmul.f32 %v518, 1.442695
    %v547 = vpow.pop %v546
    %v548 = vmul.f32 %v519, 1.442695
    %v549 = vpow.pop %v548
    %v550 = vmul.f32 %v520, 1.442695
    %v551 = vpow.pop %v550
    %v552 = vmul.f32 %v521, 1.442695
    %v553 = vpow.pop %v552
    %v554 = vsel %vm457, %v523, 0.0
    %555 = vadd.xlane.f32.xlu0 %v554
    %v556 = vpop.xlane.xlu0 %555
    %v557 = vsel %vm457, %v525, 0.0
    %558 = vadd.xlane.f32.xlu0 %v557
    %v559 = vpop.xlane.xlu0 %558
    %v560 = vsel %vm457, %v527, 0.0
    %561 = vadd.xlane.f32.xlu0 %v560
    %v562 = vpop.xlane.xlu0 %561
    %v563 = vsel %vm457, %v529, 0.0
    %564 = vadd.xlane.f32.xlu0 %v563
    %v565 = vpop.xlane.xlu0 %564
    %v566 = vsel %vm457, %v531, 0.0
    %567 = vadd.xlane.f32.xlu0 %v566
    %v568 = vpop.xlane.xlu0 %567
    %v569 = vsel %vm457, %v533, 0.0
    %570 = vadd.xlane.f32.xlu0 %v569
    %v571 = vpop.xlane.xlu0 %570
    %v572 = vsel %vm457, %v535, 0.0
    %573 = vadd.xlane.f32.xlu0 %v572
    %v574 = vpop.xlane.xlu0 %573
    %v575 = vsel %vm457, %v537, 0.0
    %576 = vadd.xlane.f32.xlu0 %v575
    %v577 = vpop.xlane.xlu0 %576
    %v578 = vsel %vm457, %v539, 0.0
    %579 = vadd.xlane.f32.xlu0 %v578
    %v580 = vpop.xlane.xlu0 %579
    %v581 = vsel %vm457, %v541, 0.0
    %582 = vadd.xlane.f32.xlu0 %v581
    %v583 = vpop.xlane.xlu0 %582
    %v584 = vsel %vm457, %v543, 0.0
    %585 = vadd.xlane.f32.xlu0 %v584
    %v586 = vpop.xlane.xlu0 %585
    %v587 = vsel %vm457, %v545, 0.0
    %588 = vadd.xlane.f32.xlu0 %v587
    %v589 = vpop.xlane.xlu0 %588
    %v590 = vsel %vm457, %v547, 0.0
    %591 = vadd.xlane.f32.xlu0 %v590
    %v592 = vpop.xlane.xlu0 %591
    %v593 = vsel %vm457, %v549, 0.0
    %594 = vadd.xlane.f32.xlu0 %v593
    %v595 = vpop.xlane.xlu0 %594
    %v596 = vsel %vm457, %v551, 0.0
    %597 = vadd.xlane.f32.xlu0 %v596
    %v598 = vpop.xlane.xlu0 %597
    %v599 = vsel %vm457, %v553, 0.0
    %600 = vadd.xlane.f32.xlu0 %v599
    %v601 = vpop.xlane.xlu0 %600
    %v602 = vrcp.pop %v556
    %v603 = vrcp.pop %v559
    %v604 = vrcp.pop %v562
    %v605 = vrcp.pop %v565
    %v606 = vrcp.pop %v568
    %v607 = vrcp.pop %v571
    %v608 = vrcp.pop %v574
    %v609 = vrcp.pop %v577
    %v610 = vrcp.pop %v580
    %v611 = vrcp.pop %v583
    %v612 = vrcp.pop %v586
    %v613 = vrcp.pop %v589
    %v614 = vrcp.pop %v592
    %v615 = vrcp.pop %v595
    %v616 = vrcp.pop %v598
    %v617 = vrcp.pop %v601
    %v618 = vmul.f32 %v523, %v602
    %v619 = vmul.f32 %v525, %v603
    %v620 = vmul.f32 %v527, %v604
    %v621 = vmul.f32 %v529, %v605
    %v622 = vmul.f32 %v531, %v606
    %v623 = vmul.f32 %v533, %v607
    %v624 = vmul.f32 %v535, %v608
    %v625 = vmul.f32 %v537, %v609
    %v626 = vmul.f32 %v539, %v610
    %v627 = vmul.f32 %v541, %v611
    %v628 = vmul.f32 %v543, %v612
    %v629 = vmul.f32 %v545, %v613
    %v630 = vmul.f32 %v547, %v614
    %v631 = vmul.f32 %v549, %v615
    %v632 = vmul.f32 %v551, %v616
    %v633 = vmul.f32 %v553, %v617
    %vm634 = vcmask 130112
    %v635 = vsel %vm634, %v395, -inf
    %636 = vmax.xlane.f32.xlu0 %v635
    %v637 = vpop.xlane.xlu0 %636
    %v638 = vsel %vm634, %v398, -inf
    %639 = vmax.xlane.f32.xlu0 %v638
    %v640 = vpop.xlane.xlu0 %639
    %v641 = vsel %vm634, %v403, -inf
    %642 = vmax.xlane.f32.xlu0 %v641
    %v643 = vpop.xlane.xlu0 %642
    %v644 = vsel %vm634, %v406, -inf
    %645 = vmax.xlane.f32.xlu0 %v644
    %v646 = vpop.xlane.xlu0 %645
    %v647 = vsel %vm634, %v411, -inf
    %648 = vmax.xlane.f32.xlu0 %v647
    %v649 = vpop.xlane.xlu0 %648
    %v650 = vsel %vm634, %v414, -inf
    %651 = vmax.xlane.f32.xlu0 %v650
    %v652 = vpop.xlane.xlu0 %651
    %v653 = vsel %vm634, %v419, -inf
    %654 = vmax.xlane.f32.xlu0 %v653
    %v655 = vpop.xlane.xlu0 %654
    %v656 = vsel %vm634, %v422, -inf
    %657 = vmax.xlane.f32.xlu0 %v656
    %v658 = vpop.xlane.xlu0 %657
    %v659 = vsel %vm634, %v427, -inf
    %660 = vmax.xlane.f32.xlu0 %v659
    %v661 = vpop.xlane.xlu0 %660
    %v662 = vsel %vm634, %v430, -inf
    %663 = vmax.xlane.f32.xlu0 %v662
    %v664 = vpop.xlane.xlu0 %663
    %v665 = vsel %vm634, %v435, -inf
    %666 = vmax.xlane.f32.xlu0 %v665
    %v667 = vpop.xlane.xlu0 %666
    %v668 = vsel %vm634, %v438, -inf
    %669 = vmax.xlane.f32.xlu0 %v668
    %v670 = vpop.xlane.xlu0 %669
    %v671 = vsel %vm634, %v443, -inf
    %672 = vmax.xlane.f32.xlu0 %v671
    %v673 = vpop.xlane.xlu0 %672
    %v674 = vsel %vm634, %v446, -inf
    %675 = vmax.xlane.f32.xlu0 %v674
    %v676 = vpop.xlane.xlu0 %675
    %v677 = vsel %vm634, %v451, -inf
    %678 = vmax.xlane.f32.xlu0 %v677
    %v679 = vpop.xlane.xlu0 %678
    %v680 = vsel %vm634, %v454, -inf
    %681 = vmax.xlane.f32.xlu0 %v680
    %v682 = vpop.xlane.xlu0 %681
    %v683 = vsub.f32 %v395, %v637
    %v684 = vsub.f32 %v398, %v640
    %v685 = vsub.f32 %v403, %v643
    %v686 = vsub.f32 %v406, %v646
    %v687 = vsub.f32 %v411, %v649
    %v688 = vsub.f32 %v414, %v652
    %v689 = vsub.f32 %v419, %v655
    %v690 = vsub.f32 %v422, %v658
    %v691 = vsub.f32 %v427, %v661
    %v692 = vsub.f32 %v430, %v664
    %v693 = vsub.f32 %v435, %v667
    %v694 = vsub.f32 %v438, %v670
    %v695 = vsub.f32 %v443, %v673
    %v696 = vsub.f32 %v446, %v676
    %v697 = vsub.f32 %v451, %v679
    %v698 = vsub.f32 %v454, %v682
    %v699 = vmul.f32 %v683, 1.442695
    %v700 = vpow.pop %v699
    %v701 = vmul.f32 %v684, 1.442695
    %v702 = vpow.pop %v701
    %v703 = vmul.f32 %v685, 1.442695
    %v704 = vpow.pop %v703
    %v705 = vmul.f32 %v686, 1.442695
    %v706 = vpow.pop %v705
    %v707 = vmul.f32 %v687, 1.442695
    %v708 = vpow.pop %v707
    %v709 = vmul.f32 %v688, 1.442695
    %v710 = vpow.pop %v709
    %v711 = vmul.f32 %v689, 1.442695
    %v712 = vpow.pop %v711
    %v713 = vmul.f32 %v690, 1.442695
    %v714 = vpow.pop %v713
    %v715 = vmul.f32 %v691, 1.442695
    %v716 = vpow.pop %v715
    %v717 = vmul.f32 %v692, 1.442695
    %v718 = vpow.pop %v717
    %v719 = vmul.f32 %v693, 1.442695
    %v720 = vpow.pop %v719
    %v721 = vmul.f32 %v694, 1.442695
    %v722 = vpow.pop %v721
    %v723 = vmul.f32 %v695, 1.442695
    %v724 = vpow.pop %v723
    %v725 = vmul.f32 %v696, 1.442695
    %v726 = vpow.pop %v725
    %v727 = vmul.f32 %v697, 1.442695
    %v728 = vpow.pop %v727
    %v729 = vmul.f32 %v698, 1.442695
    %v730 = vpow.pop %v729
    %747 = vrot.lane.b32.xlu0 %v700, 120
    %v748 = vpop.permute.xlu0 %747
    %749 = vrot.lane.b32.xlu0 %v702, 120
    %v750 = vpop.permute.xlu0 %749
    %751 = vrot.lane.b32.xlu0 %v704, 120
    %v752 = vpop.permute.xlu0 %751
    %753 = vrot.lane.b32.xlu0 %v706, 120
    %v754 = vpop.permute.xlu0 %753
    %755 = vrot.lane.b32.xlu0 %v708, 120
    %v756 = vpop.permute.xlu0 %755
    %757 = vrot.lane.b32.xlu0 %v710, 120
    %v758 = vpop.permute.xlu0 %757
    %759 = vrot.lane.b32.xlu0 %v712, 120
    %v760 = vpop.permute.xlu0 %759
    %761 = vrot.lane.b32.xlu0 %v714, 120
    %v762 = vpop.permute.xlu0 %761
    %763 = vrot.lane.b32.xlu0 %v716, 120
    %v764 = vpop.permute.xlu0 %763
    %765 = vrot.lane.b32.xlu0 %v718, 120
    %v766 = vpop.permute.xlu0 %765
    %767 = vrot.lane.b32.xlu0 %v720, 120
    %v768 = vpop.permute.xlu0 %767
    %769 = vrot.lane.b32.xlu0 %v722, 120
    %v770 = vpop.permute.xlu0 %769
    %771 = vrot.lane.b32.xlu0 %v724, 120
    %v772 = vpop.permute.xlu0 %771
    %773 = vrot.lane.b32.xlu0 %v726, 120
    %v774 = vpop.permute.xlu0 %773
    %775 = vrot.lane.b32.xlu0 %v728, 120
    %v776 = vpop.permute.xlu0 %775
    %777 = vrot.lane.b32.xlu0 %v730, 120
    %v778 = vpop.permute.xlu0 %777
    %v795 = vsel %vm457, %v748, 0.0
    %796 = vadd.xlane.f32.xlu0 %v795
    %v797 = vpop.xlane.xlu0 %796
    %v798 = vsel %vm457, %v750, 0.0
    %799 = vadd.xlane.f32.xlu0 %v798
    %v800 = vpop.xlane.xlu0 %799
    %v801 = vsel %vm457, %v752, 0.0
    %802 = vadd.xlane.f32.xlu0 %v801
    %v803 = vpop.xlane.xlu0 %802
    %v804 = vsel %vm457, %v754, 0.0
    %805 = vadd.xlane.f32.xlu0 %v804
    %v806 = vpop.xlane.xlu0 %805
    %v807 = vsel %vm457, %v756, 0.0
    %808 = vadd.xlane.f32.xlu0 %v807
    %v809 = vpop.xlane.xlu0 %808
    %v810 = vsel %vm457, %v758, 0.0
    %811 = vadd.xlane.f32.xlu0 %v810
    %v812 = vpop.xlane.xlu0 %811
    %v813 = vsel %vm457, %v760, 0.0
    %814 = vadd.xlane.f32.xlu0 %v813
    %v815 = vpop.xlane.xlu0 %814
    %v816 = vsel %vm457, %v762, 0.0
    %817 = vadd.xlane.f32.xlu0 %v816
    %v818 = vpop.xlane.xlu0 %817
    %v819 = vsel %vm457, %v764, 0.0
    %820 = vadd.xlane.f32.xlu0 %v819
    %v821 = vpop.xlane.xlu0 %820
    %v822 = vsel %vm457, %v766, 0.0
    %823 = vadd.xlane.f32.xlu0 %v822
    %v824 = vpop.xlane.xlu0 %823
    %v825 = vsel %vm457, %v768, 0.0
    %826 = vadd.xlane.f32.xlu0 %v825
    %v827 = vpop.xlane.xlu0 %826
    %v828 = vsel %vm457, %v770, 0.0
    %829 = vadd.xlane.f32.xlu0 %v828
    %v830 = vpop.xlane.xlu0 %829
    %v831 = vsel %vm457, %v772, 0.0
    %832 = vadd.xlane.f32.xlu0 %v831
    %v833 = vpop.xlane.xlu0 %832
    %v834 = vsel %vm457, %v774, 0.0
    %835 = vadd.xlane.f32.xlu0 %v834
    %v836 = vpop.xlane.xlu0 %835
    %v837 = vsel %vm457, %v776, 0.0
    %838 = vadd.xlane.f32.xlu0 %v837
    %v839 = vpop.xlane.xlu0 %838
    %v840 = vsel %vm457, %v778, 0.0
    %841 = vadd.xlane.f32.xlu0 %v840
    %v842 = vpop.xlane.xlu0 %841
    %v843 = vrcp.pop %v797
    %v844 = vrcp.pop %v800
    %v845 = vrcp.pop %v803
    %v846 = vrcp.pop %v806
    %v847 = vrcp.pop %v809
    %v848 = vrcp.pop %v812
    %v849 = vrcp.pop %v815
    %v850 = vrcp.pop %v818
    %v851 = vrcp.pop %v821
    %v852 = vrcp.pop %v824
    %v853 = vrcp.pop %v827
    %v854 = vrcp.pop %v830
    %v855 = vrcp.pop %v833
    %v856 = vrcp.pop %v836
    %v857 = vrcp.pop %v839
    %v858 = vrcp.pop %v842
    %v859 = vmul.f32 %v700, %v843
    %v860 = vmul.f32 %v702, %v844
    %v861 = vmul.f32 %v704, %v845
    %v862 = vmul.f32 %v706, %v846
    %v863 = vmul.f32 %v708, %v847
    %v864 = vmul.f32 %v710, %v848
    %v865 = vmul.f32 %v712, %v849
    %v866 = vmul.f32 %v714, %v850
    %v867 = vmul.f32 %v716, %v851
    %v868 = vmul.f32 %v718, %v852
    %v869 = vmul.f32 %v720, %v853
    %v870 = vmul.f32 %v722, %v854
    %v871 = vmul.f32 %v724, %v855
    %v872 = vmul.f32 %v726, %v856
    %v873 = vmul.f32 %v728, %v857
    %v874 = vmul.f32 %v730, %v858
    %vm875 = vcmask 195712
    %v876 = vsel %vm875, %v395, -inf
    %877 = vmax.xlane.f32.xlu0 %v876
    %v878 = vpop.xlane.xlu0 %877
    %v879 = vsel %vm875, %v398, -inf
    %880 = vmax.xlane.f32.xlu0 %v879
    %v881 = vpop.xlane.xlu0 %880
    %v882 = vsel %vm875, %v403, -inf
    %883 = vmax.xlane.f32.xlu0 %v882
    %v884 = vpop.xlane.xlu0 %883
    %v885 = vsel %vm875, %v406, -inf
    %886 = vmax.xlane.f32.xlu0 %v885
    %v887 = vpop.xlane.xlu0 %886
    %v888 = vsel %vm875, %v411, -inf
    %889 = vmax.xlane.f32.xlu0 %v888
    %v890 = vpop.xlane.xlu0 %889
    %v891 = vsel %vm875, %v414, -inf
    %892 = vmax.xlane.f32.xlu0 %v891
    %v893 = vpop.xlane.xlu0 %892
    %v894 = vsel %vm875, %v419, -inf
    %895 = vmax.xlane.f32.xlu0 %v894
    %v896 = vpop.xlane.xlu0 %895
    %v897 = vsel %vm875, %v422, -inf
    %898 = vmax.xlane.f32.xlu0 %v897
    %v899 = vpop.xlane.xlu0 %898
    %v900 = vsel %vm875, %v427, -inf
    %901 = vmax.xlane.f32.xlu0 %v900
    %v902 = vpop.xlane.xlu0 %901
    %v903 = vsel %vm875, %v430, -inf
    %904 = vmax.xlane.f32.xlu0 %v903
    %v905 = vpop.xlane.xlu0 %904
    %v906 = vsel %vm875, %v435, -inf
    %907 = vmax.xlane.f32.xlu0 %v906
    %v908 = vpop.xlane.xlu0 %907
    %v909 = vsel %vm875, %v438, -inf
    %910 = vmax.xlane.f32.xlu0 %v909
    %v911 = vpop.xlane.xlu0 %910
    %v912 = vsel %vm875, %v443, -inf
    %913 = vmax.xlane.f32.xlu0 %v912
    %v914 = vpop.xlane.xlu0 %913
    %v915 = vsel %vm875, %v446, -inf
    %916 = vmax.xlane.f32.xlu0 %v915
    %v917 = vpop.xlane.xlu0 %916
    %v918 = vsel %vm875, %v451, -inf
    %919 = vmax.xlane.f32.xlu0 %v918
    %v920 = vpop.xlane.xlu0 %919
    %v921 = vsel %vm875, %v454, -inf
    %922 = vmax.xlane.f32.xlu0 %v921
    %v923 = vpop.xlane.xlu0 %922
    %v924 = vsub.f32 %v395, %v878
    %v925 = vsub.f32 %v398, %v881
    %v926 = vsub.f32 %v403, %v884
    %v927 = vsub.f32 %v406, %v887
    %v928 = vsub.f32 %v411, %v890
    %v929 = vsub.f32 %v414, %v893
    %v930 = vsub.f32 %v419, %v896
    %v931 = vsub.f32 %v422, %v899
    %v932 = vsub.f32 %v427, %v902
    %v933 = vsub.f32 %v430, %v905
    %v934 = vsub.f32 %v435, %v908
    %v935 = vsub.f32 %v438, %v911
    %v936 = vsub.f32 %v443, %v914
    %v937 = vsub.f32 %v446, %v917
    %v938 = vsub.f32 %v451, %v920
    %v939 = vsub.f32 %v454, %v923
    %v940 = vmul.f32 %v924, 1.442695
    %v941 = vpow.pop %v940
    %v942 = vmul.f32 %v925, 1.442695
    %v943 = vpow.pop %v942
    %v944 = vmul.f32 %v926, 1.442695
    %v945 = vpow.pop %v944
    %v946 = vmul.f32 %v927, 1.442695
    %v947 = vpow.pop %v946
    %v948 = vmul.f32 %v928, 1.442695
    %v949 = vpow.pop %v948
    %v950 = vmul.f32 %v929, 1.442695
    %v951 = vpow.pop %v950
    %v952 = vmul.f32 %v930, 1.442695
    %v953 = vpow.pop %v952
    %v954 = vmul.f32 %v931, 1.442695
    %v955 = vpow.pop %v954
    %v956 = vmul.f32 %v932, 1.442695
    %v957 = vpow.pop %v956
    %v958 = vmul.f32 %v933, 1.442695
    %v959 = vpow.pop %v958
    %v960 = vmul.f32 %v934, 1.442695
    %v961 = vpow.pop %v960
    %v962 = vmul.f32 %v935, 1.442695
    %v963 = vpow.pop %v962
    %v964 = vmul.f32 %v936, 1.442695
    %v965 = vpow.pop %v964
    %v966 = vmul.f32 %v937, 1.442695
    %v967 = vpow.pop %v966
    %v968 = vmul.f32 %v938, 1.442695
    %v969 = vpow.pop %v968
    %v970 = vmul.f32 %v939, 1.442695
    %v971 = vpow.pop %v970
    %988 = vrot.lane.b32.xlu0 %v941, 112
    %v989 = vpop.permute.xlu0 %988
    %990 = vrot.lane.b32.xlu0 %v943, 112
    %v991 = vpop.permute.xlu0 %990
    %992 = vrot.lane.b32.xlu0 %v945, 112
    %v993 = vpop.permute.xlu0 %992
    %994 = vrot.lane.b32.xlu0 %v947, 112
    %v995 = vpop.permute.xlu0 %994
    %996 = vrot.lane.b32.xlu0 %v949, 112
    %v997 = vpop.permute.xlu0 %996
    %998 = vrot.lane.b32.xlu0 %v951, 112
    %v999 = vpop.permute.xlu0 %998
    %1000 = vrot.lane.b32.xlu0 %v953, 112
    %v1001 = vpop.permute.xlu0 %1000
    %1002 = vrot.lane.b32.xlu0 %v955, 112
    %v1003 = vpop.permute.xlu0 %1002
    %1004 = vrot.lane.b32.xlu0 %v957, 112
    %v1005 = vpop.permute.xlu0 %1004
    %1006 = vrot.lane.b32.xlu0 %v959, 112
    %v1007 = vpop.permute.xlu0 %1006
    %1008 = vrot.lane.b32.xlu0 %v961, 112
    %v1009 = vpop.permute.xlu0 %1008
    %1010 = vrot.lane.b32.xlu0 %v963, 112
    %v1011 = vpop.permute.xlu0 %1010
    %1012 = vrot.lane.b32.xlu0 %v965, 112
    %v1013 = vpop.permute.xlu0 %1012
    %1014 = vrot.lane.b32.xlu0 %v967, 112
    %v1015 = vpop.permute.xlu0 %1014
    %1016 = vrot.lane.b32.xlu0 %v969, 112
    %v1017 = vpop.permute.xlu0 %1016
    %1018 = vrot.lane.b32.xlu0 %v971, 112
    %v1019 = vpop.permute.xlu0 %1018
    %v1036 = vsel %vm457, %v989, 0.0
    %1037 = vadd.xlane.f32.xlu0 %v1036
    %v1038 = vpop.xlane.xlu0 %1037
    %v1039 = vsel %vm457, %v991, 0.0
    %1040 = vadd.xlane.f32.xlu0 %v1039
    %v1041 = vpop.xlane.xlu0 %1040
    %v1042 = vsel %vm457, %v993, 0.0
    %1043 = vadd.xlane.f32.xlu0 %v1042
    %v1044 = vpop.xlane.xlu0 %1043
    %v1045 = vsel %vm457, %v995, 0.0
    %1046 = vadd.xlane.f32.xlu0 %v1045
    %v1047 = vpop.xlane.xlu0 %1046
    %v1048 = vsel %vm457, %v997, 0.0
    %1049 = vadd.xlane.f32.xlu0 %v1048
    %v1050 = vpop.xlane.xlu0 %1049
    %v1051 = vsel %vm457, %v999, 0.0
    %1052 = vadd.xlane.f32.xlu0 %v1051
    %v1053 = vpop.xlane.xlu0 %1052
    %v1054 = vsel %vm457, %v1001, 0.0
    %1055 = vadd.xlane.f32.xlu0 %v1054
    %v1056 = vpop.xlane.xlu0 %1055
    %v1057 = vsel %vm457, %v1003, 0.0
    %1058 = vadd.xlane.f32.xlu0 %v1057
    %v1059 = vpop.xlane.xlu0 %1058
    %v1060 = vsel %vm457, %v1005, 0.0
    %1061 = vadd.xlane.f32.xlu0 %v1060
    %v1062 = vpop.xlane.xlu0 %1061
    %v1063 = vsel %vm457, %v1007, 0.0
    %1064 = vadd.xlane.f32.xlu0 %v1063
    %v1065 = vpop.xlane.xlu0 %1064
    %v1066 = vsel %vm457, %v1009, 0.0
    %1067 = vadd.xlane.f32.xlu0 %v1066
    %v1068 = vpop.xlane.xlu0 %1067
    %v1069 = vsel %vm457, %v1011, 0.0
    %1070 = vadd.xlane.f32.xlu0 %v1069
    %v1071 = vpop.xlane.xlu0 %1070
    %v1072 = vsel %vm457, %v1013, 0.0
    %1073 = vadd.xlane.f32.xlu0 %v1072
    %v1074 = vpop.xlane.xlu0 %1073
    %v1075 = vsel %vm457, %v1015, 0.0
    %1076 = vadd.xlane.f32.xlu0 %v1075
    %v1077 = vpop.xlane.xlu0 %1076
    %v1078 = vsel %vm457, %v1017, 0.0
    %1079 = vadd.xlane.f32.xlu0 %v1078
    %v1080 = vpop.xlane.xlu0 %1079
    %v1081 = vsel %vm457, %v1019, 0.0
    %1082 = vadd.xlane.f32.xlu0 %v1081
    %v1083 = vpop.xlane.xlu0 %1082
    %v1084 = vrcp.pop %v1038
    %v1085 = vrcp.pop %v1041
    %v1086 = vrcp.pop %v1044
    %v1087 = vrcp.pop %v1047
    %v1088 = vrcp.pop %v1050
    %v1089 = vrcp.pop %v1053
    %v1090 = vrcp.pop %v1056
    %v1091 = vrcp.pop %v1059
    %v1092 = vrcp.pop %v1062
    %v1093 = vrcp.pop %v1065
    %v1094 = vrcp.pop %v1068
    %v1095 = vrcp.pop %v1071
    %v1096 = vrcp.pop %v1074
    %v1097 = vrcp.pop %v1077
    %v1098 = vrcp.pop %v1080
    %v1099 = vrcp.pop %v1083
    %v1100 = vmul.f32 %v941, %v1084
    %v1101 = vmul.f32 %v943, %v1085
    %v1102 = vmul.f32 %v945, %v1086
    %v1103 = vmul.f32 %v947, %v1087
    %v1104 = vmul.f32 %v949, %v1088
    %v1105 = vmul.f32 %v951, %v1089
    %v1106 = vmul.f32 %v953, %v1090
    %v1107 = vmul.f32 %v955, %v1091
    %v1108 = vmul.f32 %v957, %v1092
    %v1109 = vmul.f32 %v959, %v1093
    %v1110 = vmul.f32 %v961, %v1094
    %v1111 = vmul.f32 %v963, %v1095
    %v1112 = vmul.f32 %v965, %v1096
    %v1113 = vmul.f32 %v967, %v1097
    %v1114 = vmul.f32 %v969, %v1098
    %v1115 = vmul.f32 %v971, %v1099
    %vm1116 = vcmask 261312
    %v1117 = vsel %vm1116, %v395, -inf
    %1118 = vmax.xlane.f32.xlu0 %v1117
    %v1119 = vpop.xlane.xlu0 %1118
    %v1120 = vsel %vm1116, %v398, -inf
    %1121 = vmax.xlane.f32.xlu0 %v1120
    %v1122 = vpop.xlane.xlu0 %1121
    %v1123 = vsel %vm1116, %v403, -inf
    %1124 = vmax.xlane.f32.xlu0 %v1123
    %v1125 = vpop.xlane.xlu0 %1124
    %v1126 = vsel %vm1116, %v406, -inf
    %1127 = vmax.xlane.f32.xlu0 %v1126
    %v1128 = vpop.xlane.xlu0 %1127
    %v1129 = vsel %vm1116, %v411, -inf
    %1130 = vmax.xlane.f32.xlu0 %v1129
    %v1131 = vpop.xlane.xlu0 %1130
    %v1132 = vsel %vm1116, %v414, -inf
    %1133 = vmax.xlane.f32.xlu0 %v1132
    %v1134 = vpop.xlane.xlu0 %1133
    %v1135 = vsel %vm1116, %v419, -inf
    %1136 = vmax.xlane.f32.xlu0 %v1135
    %v1137 = vpop.xlane.xlu0 %1136
    %v1138 = vsel %vm1116, %v422, -inf
    %1139 = vmax.xlane.f32.xlu0 %v1138
    %v1140 = vpop.xlane.xlu0 %1139
    %v1141 = vsel %vm1116, %v427, -inf
    %1142 = vmax.xlane.f32.xlu0 %v1141
    %v1143 = vpop.xlane.xlu0 %1142
    %v1144 = vsel %vm1116, %v430, -inf
    %1145 = vmax.xlane.f32.xlu0 %v1144
    %v1146 = vpop.xlane.xlu0 %1145
    %v1147 = vsel %vm1116, %v435, -inf
    %1148 = vmax.xlane.f32.xlu0 %v1147
    %v1149 = vpop.xlane.xlu0 %1148
    %v1150 = vsel %vm1116, %v438, -inf
    %1151 = vmax.xlane.f32.xlu0 %v1150
    %v1152 = vpop.xlane.xlu0 %1151
    %v1153 = vsel %vm1116, %v443, -inf
    %1154 = vmax.xlane.f32.xlu0 %v1153
    %v1155 = vpop.xlane.xlu0 %1154
    %v1156 = vsel %vm1116, %v446, -inf
    %1157 = vmax.xlane.f32.xlu0 %v1156
    %v1158 = vpop.xlane.xlu0 %1157
    %v1159 = vsel %vm1116, %v451, -inf
    %1160 = vmax.xlane.f32.xlu0 %v1159
    %v1161 = vpop.xlane.xlu0 %1160
    %v1162 = vsel %vm1116, %v454, -inf
    %1163 = vmax.xlane.f32.xlu0 %v1162
    %v1164 = vpop.xlane.xlu0 %1163
    %v1165 = vsub.f32 %v395, %v1119
    %v1166 = vsub.f32 %v398, %v1122
    %v1167 = vsub.f32 %v403, %v1125
    %v1168 = vsub.f32 %v406, %v1128
    %v1169 = vsub.f32 %v411, %v1131
    %v1170 = vsub.f32 %v414, %v1134
    %v1171 = vsub.f32 %v419, %v1137
    %v1172 = vsub.f32 %v422, %v1140
    %v1173 = vsub.f32 %v427, %v1143
    %v1174 = vsub.f32 %v430, %v1146
    %v1175 = vsub.f32 %v435, %v1149
    %v1176 = vsub.f32 %v438, %v1152
    %v1177 = vsub.f32 %v443, %v1155
    %v1178 = vsub.f32 %v446, %v1158
    %v1179 = vsub.f32 %v451, %v1161
    %v1180 = vsub.f32 %v454, %v1164
    %v1181 = vmul.f32 %v1165, 1.442695
    %v1182 = vpow.pop %v1181
    %v1183 = vmul.f32 %v1166, 1.442695
    %v1184 = vpow.pop %v1183
    %v1185 = vmul.f32 %v1167, 1.442695
    %v1186 = vpow.pop %v1185
    %v1187 = vmul.f32 %v1168, 1.442695
    %v1188 = vpow.pop %v1187
    %v1189 = vmul.f32 %v1169, 1.442695
    %v1190 = vpow.pop %v1189
    %v1191 = vmul.f32 %v1170, 1.442695
    %v1192 = vpow.pop %v1191
    %v1193 = vmul.f32 %v1171, 1.442695
    %v1194 = vpow.pop %v1193
    %v1195 = vmul.f32 %v1172, 1.442695
    %v1196 = vpow.pop %v1195
    %v1197 = vmul.f32 %v1173, 1.442695
    %v1198 = vpow.pop %v1197
    %v1199 = vmul.f32 %v1174, 1.442695
    %v1200 = vpow.pop %v1199
    %v1201 = vmul.f32 %v1175, 1.442695
    %v1202 = vpow.pop %v1201
    %v1203 = vmul.f32 %v1176, 1.442695
    %v1204 = vpow.pop %v1203
    %v1205 = vmul.f32 %v1177, 1.442695
    %v1206 = vpow.pop %v1205
    %v1207 = vmul.f32 %v1178, 1.442695
    %v1208 = vpow.pop %v1207
    %v1209 = vmul.f32 %v1179, 1.442695
    %v1210 = vpow.pop %v1209
    %v1211 = vmul.f32 %v1180, 1.442695
    %v1212 = vpow.pop %v1211
    %1229 = vrot.lane.b32.xlu0 %v1182, 104
    %v1230 = vpop.permute.xlu0 %1229
    %1231 = vrot.lane.b32.xlu0 %v1184, 104
    %v1232 = vpop.permute.xlu0 %1231
    %1233 = vrot.lane.b32.xlu0 %v1186, 104
    %v1234 = vpop.permute.xlu0 %1233
    %1235 = vrot.lane.b32.xlu0 %v1188, 104
    %v1236 = vpop.permute.xlu0 %1235
    %1237 = vrot.lane.b32.xlu0 %v1190, 104
    %v1238 = vpop.permute.xlu0 %1237
    %1239 = vrot.lane.b32.xlu0 %v1192, 104
    %v1240 = vpop.permute.xlu0 %1239
    %1241 = vrot.lane.b32.xlu0 %v1194, 104
    %v1242 = vpop.permute.xlu0 %1241
    %1243 = vrot.lane.b32.xlu0 %v1196, 104
    %v1244 = vpop.permute.xlu0 %1243
    %1245 = vrot.lane.b32.xlu0 %v1198, 104
    %v1246 = vpop.permute.xlu0 %1245
    %1247 = vrot.lane.b32.xlu0 %v1200, 104
    %v1248 = vpop.permute.xlu0 %1247
    %1249 = vrot.lane.b32.xlu0 %v1202, 104
    %v1250 = vpop.permute.xlu0 %1249
    %1251 = vrot.lane.b32.xlu0 %v1204, 104
    %v1252 = vpop.permute.xlu0 %1251
    %1253 = vrot.lane.b32.xlu0 %v1206, 104
    %v1254 = vpop.permute.xlu0 %1253
    %1255 = vrot.lane.b32.xlu0 %v1208, 104
    %v1256 = vpop.permute.xlu0 %1255
    %1257 = vrot.lane.b32.xlu0 %v1210, 104
    %v1258 = vpop.permute.xlu0 %1257
    %1259 = vrot.lane.b32.xlu0 %v1212, 104
    %v1260 = vpop.permute.xlu0 %1259
    %v1277 = vsel %vm457, %v1230, 0.0
    %1278 = vadd.xlane.f32.xlu0 %v1277
    %v1279 = vpop.xlane.xlu0 %1278
    %v1280 = vsel %vm457, %v1232, 0.0
    %1281 = vadd.xlane.f32.xlu0 %v1280
    %v1282 = vpop.xlane.xlu0 %1281
    %v1283 = vsel %vm457, %v1234, 0.0
    %1284 = vadd.xlane.f32.xlu0 %v1283
    %v1285 = vpop.xlane.xlu0 %1284
    %v1286 = vsel %vm457, %v1236, 0.0
    %1287 = vadd.xlane.f32.xlu0 %v1286
    %v1288 = vpop.xlane.xlu0 %1287
    %v1289 = vsel %vm457, %v1238, 0.0
    %1290 = vadd.xlane.f32.xlu0 %v1289
    %v1291 = vpop.xlane.xlu0 %1290
    %v1292 = vsel %vm457, %v1240, 0.0
    %1293 = vadd.xlane.f32.xlu0 %v1292
    %v1294 = vpop.xlane.xlu0 %1293
    %v1295 = vsel %vm457, %v1242, 0.0
    %1296 = vadd.xlane.f32.xlu0 %v1295
    %v1297 = vpop.xlane.xlu0 %1296
    %v1298 = vsel %vm457, %v1244, 0.0
    %1299 = vadd.xlane.f32.xlu0 %v1298
    %v1300 = vpop.xlane.xlu0 %1299
    %v1301 = vsel %vm457, %v1246, 0.0
    %1302 = vadd.xlane.f32.xlu0 %v1301
    %v1303 = vpop.xlane.xlu0 %1302
    %v1304 = vsel %vm457, %v1248, 0.0
    %1305 = vadd.xlane.f32.xlu0 %v1304
    %v1306 = vpop.xlane.xlu0 %1305
    %v1307 = vsel %vm457, %v1250, 0.0
    %1308 = vadd.xlane.f32.xlu0 %v1307
    %v1309 = vpop.xlane.xlu0 %1308
    %v1310 = vsel %vm457, %v1252, 0.0
    %1311 = vadd.xlane.f32.xlu0 %v1310
    %v1312 = vpop.xlane.xlu0 %1311
    %v1313 = vsel %vm457, %v1254, 0.0
    %1314 = vadd.xlane.f32.xlu0 %v1313
    %v1315 = vpop.xlane.xlu0 %1314
    %v1316 = vsel %vm457, %v1256, 0.0
    %1317 = vadd.xlane.f32.xlu0 %v1316
    %v1318 = vpop.xlane.xlu0 %1317
    %v1319 = vsel %vm457, %v1258, 0.0
    %1320 = vadd.xlane.f32.xlu0 %v1319
    %v1321 = vpop.xlane.xlu0 %1320
    %v1322 = vsel %vm457, %v1260, 0.0
    %1323 = vadd.xlane.f32.xlu0 %v1322
    %v1324 = vpop.xlane.xlu0 %1323
    %v1325 = vrcp.pop %v1279
    %v1326 = vrcp.pop %v1282
    %v1327 = vrcp.pop %v1285
    %v1328 = vrcp.pop %v1288
    %v1329 = vrcp.pop %v1291
    %v1330 = vrcp.pop %v1294
    %v1331 = vrcp.pop %v1297
    %v1332 = vrcp.pop %v1300
    %v1333 = vrcp.pop %v1303
    %v1334 = vrcp.pop %v1306
    %v1335 = vrcp.pop %v1309
    %v1336 = vrcp.pop %v1312
    %v1337 = vrcp.pop %v1315
    %v1338 = vrcp.pop %v1318
    %v1339 = vrcp.pop %v1321
    %v1340 = vrcp.pop %v1324
    %v1341 = vmul.f32 %v1182, %v1325
    %v1342 = vmul.f32 %v1184, %v1326
    %v1343 = vmul.f32 %v1186, %v1327
    %v1344 = vmul.f32 %v1188, %v1328
    %v1345 = vmul.f32 %v1190, %v1329
    %v1346 = vmul.f32 %v1192, %v1330
    %v1347 = vmul.f32 %v1194, %v1331
    %v1348 = vmul.f32 %v1196, %v1332
    %v1349 = vmul.f32 %v1198, %v1333
    %v1350 = vmul.f32 %v1200, %v1334
    %v1351 = vmul.f32 %v1202, %v1335
    %v1352 = vmul.f32 %v1204, %v1336
    %v1353 = vmul.f32 %v1206, %v1337
    %v1354 = vmul.f32 %v1208, %v1338
    %v1355 = vmul.f32 %v1210, %v1339
    %v1356 = vmul.f32 %v1212, %v1340
    %v1357 = vsel %vm457, %v618, %v859
    %v1358 = vsel %vm457, %v619, %v860
    %v1359 = vsel %vm457, %v620, %v861
    %v1360 = vsel %vm457, %v621, %v862
    %v1361 = vsel %vm457, %v622, %v863
    %v1362 = vsel %vm457, %v623, %v864
    %v1363 = vsel %vm457, %v624, %v865
    %v1364 = vsel %vm457, %v625, %v866
    %v1365 = vsel %vm457, %v626, %v867
    %v1366 = vsel %vm457, %v627, %v868
    %v1367 = vsel %vm457, %v628, %v869
    %v1368 = vsel %vm457, %v629, %v870
    %v1369 = vsel %vm457, %v630, %v871
    %v1370 = vsel %vm457, %v631, %v872
    %v1371 = vsel %vm457, %v632, %v873
    %v1372 = vsel %vm457, %v633, %v874
    %vm1373 = vcmask 130048
    %v1374 = vsel %vm1373, %v1357, %v1100
    %v1375 = vsel %vm1373, %v1358, %v1101
    %v1376 = vsel %vm1373, %v1359, %v1102
    %v1377 = vsel %vm1373, %v1360, %v1103
    %v1378 = vsel %vm1373, %v1361, %v1104
    %v1379 = vsel %vm1373, %v1362, %v1105
    %v1380 = vsel %vm1373, %v1363, %v1106
    %v1381 = vsel %vm1373, %v1364, %v1107
    %v1382 = vsel %vm1373, %v1365, %v1108
    %v1383 = vsel %vm1373, %v1366, %v1109
    %v1384 = vsel %vm1373, %v1367, %v1110
    %v1385 = vsel %vm1373, %v1368, %v1111
    %v1386 = vsel %vm1373, %v1369, %v1112
    %v1387 = vsel %vm1373, %v1370, %v1113
    %v1388 = vsel %vm1373, %v1371, %v1114
    %v1389 = vsel %vm1373, %v1372, %v1115
    %vm1390 = vcmask 195584
    %v1391 = vsel %vm1390, %v1374, %v1341
    %v1392 = vsel %vm1390, %v1375, %v1342
    %v1393 = vsel %vm1390, %v1376, %v1343
    %v1394 = vsel %vm1390, %v1377, %v1344
    %v1395 = vsel %vm1390, %v1378, %v1345
    %v1396 = vsel %vm1390, %v1379, %v1346
    %v1397 = vsel %vm1390, %v1380, %v1347
    %v1398 = vsel %vm1390, %v1381, %v1348
    %v1399 = vsel %vm1390, %v1382, %v1349
    %v1400 = vsel %vm1390, %v1383, %v1350
    %v1401 = vsel %vm1390, %v1384, %v1351
    %v1402 = vsel %vm1390, %v1385, %v1352
    %v1403 = vsel %vm1390, %v1386, %v1353
    %v1404 = vsel %vm1390, %v1387, %v1354
    %v1405 = vsel %vm1390, %v1388, %v1355
    %v1406 = vsel %vm1390, %v1389, %v1356
    %v1407 = vpack.c.bf16 %v1392, %v1391
    %v1408 = vpack.c.bf16 %v1394, %v1393
    %v1409 = vpack.c.bf16 %v1396, %v1395
    %v1410 = vpack.c.bf16 %v1398, %v1397
    %v1411 = vpack.c.bf16 %v1400, %v1399
    %v1412 = vpack.c.bf16 %v1402, %v1401
    %v1413 = vpack.c.bf16 %v1404, %v1403
    %v1414 = vpack.c.bf16 %v1406, %v1405
    %v1415 = vld [vmem:[%s4] sm:$0xf]
    %v1416 = vld [vmem:[%s4 + $0x4] sm:$0xf]
    %v1417 = vld [vmem:[%s4 + $0x8] sm:$0xf]
    %v1418 = vld [vmem:[%s4 + $0xc] sm:$0xf]
    %v1423 = vunpack.c.l.b16 %v1415
    %v1424 = vunpack.c.l.b16 %v1416
    %v1425 = vunpack.c.l.b16 %v1417
    %v1426 = vunpack.c.l.b16 %v1418
    %v1427 = vpack.c.b16 %v1424, %v1423
    %v1428 = vpack.c.b16 %v1426, %v1425
    %vm1431 = vcmask 261120
    %v1433 = vsel %vm1431, %v1407, 0
    %v1436 = vsel %vm1431, %v1408, 0
    %v1439 = vsel %vm1431, %v1409, 0
    %v1442 = vsel %vm1431, %v1410, 0
    %v1445 = vsel %vm1431, %v1411, 0
    %v1448 = vsel %vm1431, %v1412, 0
    %v1451 = vsel %vm1431, %v1413, 0
    %v1454 = vsel %vm1431, %v1414, 0
    %1456 = vmatprep.subr.bf16.mxu0 0
    %1457 = vmatpush1.bf16.msra.mxu0 0
    %1458 = vmatprep.subr.bf16.mxu0 0
    %1459 = vmatpush1.bf16.msra.mxu0 0
    %1460 = vmatprep.subr.bf16.mxu0 0
    %1461 = vmatpush1.bf16.msra.mxu0 0
    %1462 = vmatprep.subr.bf16.mxu0 0
    %1463 = vmatpush1.bf16.msra.mxu0 0
    %1464 = vmatprep.subr.bf16.mxu0 0
    %1465 = vmatpush1.bf16.msra.mxu0 0
    %1466 = vmatprep.subr.bf16.mxu0 0
    %1467 = vmatpush1.bf16.msra.mxu0 0
    %1468 = vmatprep.subr.bf16.mxu0 0
    %1469 = vmatpush1.bf16.msra.mxu0 %v1428
    %1470 = vmatprep.subr.bf16.mxu0 0
    %1471 = vmatpush1.bf16.msra.mxu0 %v1427
    %1472 = vmatprep.subr.bf16.mxu0 0
    %1473 = vmatpush2.bf16.msra.mxu0 0
    %1474 = vmatprep.subr.bf16.mxu0 0
    %1475 = vmatpush2.bf16.msra.mxu0 0
    %1476 = vmatprep.subr.bf16.mxu0 0
    %1477 = vmatpush2.bf16.msra.mxu0 0
    %1478 = vmatprep.subr.bf16.mxu0 0
    %1479 = vmatpush2.bf16.msra.mxu0 0
    %1480 = vmatprep.subr.bf16.mxu0 0
    %1481 = vmatpush2.bf16.msra.mxu0 0
    %1482 = vmatprep.subr.bf16.mxu0 0
    %1483 = vmatpush2.bf16.msra.mxu0 0
    %1484 = vmatprep.subr.bf16.mxu0 0
    %1485 = vmatpush2.bf16.msra.mxu0 0
    %1486 = vmatprep.subr.bf16.mxu0 0
    %1487 = vmatpush2.bf16.msra.mxu0 0
    %1488 = vmatprep.mubr.bf16.mxu0 0
    %1489 = vmatmul.mubr.bf16.gmra.mxu0 %v1433
    %v1490 = vpop.f32.mrf.mxu0
    %v1491 = vadd.f32 0.0, %v1490
    %v1492 = vpop.f32.mrf.mxu0
    %v1493 = vpop.f32.mrf.mxu0
    %v1494 = vadd.f32 0.0, %v1493
    %v1495 = vpop.f32.mrf.mxu0
    %1496 = vmatprep.mubr.bf16.mxu0 0
    %1497 = vmatmul.mubr.bf16.gmra.mxu0 %v1436
    %v1498 = vpop.f32.mrf.mxu0
    %v1499 = vadd.f32 0.0, %v1498
    %v1500 = vpop.f32.mrf.mxu0
    %v1501 = vpop.f32.mrf.mxu0
    %v1502 = vadd.f32 0.0, %v1501
    %v1503 = vpop.f32.mrf.mxu0
    %1504 = vmatprep.mubr.bf16.mxu0 0
    %1505 = vmatmul.mubr.bf16.gmra.mxu0 %v1439
    %v1506 = vpop.f32.mrf.mxu0
    %v1507 = vadd.f32 0.0, %v1506
    %v1508 = vpop.f32.mrf.mxu0
    %v1509 = vpop.f32.mrf.mxu0
    %v1510 = vadd.f32 0.0, %v1509
    %v1511 = vpop.f32.mrf.mxu0
    %1512 = vmatprep.mubr.bf16.mxu0 0
    %1513 = vmatmul.mubr.bf16.gmra.mxu0 %v1442
    %v1514 = vpop.f32.mrf.mxu0
    %v1515 = vadd.f32 0.0, %v1514
    %v1516 = vpop.f32.mrf.mxu0
    %v1517 = vpop.f32.mrf.mxu0
    %v1518 = vadd.f32 0.0, %v1517
    %v1519 = vpop.f32.mrf.mxu0
    %1520 = vmatprep.mubr.bf16.mxu0 0
    %1521 = vmatmul.mubr.bf16.gmra.mxu0 %v1445
    %v1522 = vpop.f32.mrf.mxu0
    %v1523 = vadd.f32 0.0, %v1522
    %v1524 = vpop.f32.mrf.mxu0
    %v1525 = vpop.f32.mrf.mxu0
    %v1526 = vadd.f32 0.0, %v1525
    %v1527 = vpop.f32.mrf.mxu0
    %1528 = vmatprep.mubr.bf16.mxu0 0
    %1529 = vmatmul.mubr.bf16.gmra.mxu0 %v1448
    %v1530 = vpop.f32.mrf.mxu0
    %v1531 = vadd.f32 0.0, %v1530
    %v1532 = vpop.f32.mrf.mxu0
    %v1533 = vpop.f32.mrf.mxu0
    %v1534 = vadd.f32 0.0, %v1533
    %v1535 = vpop.f32.mrf.mxu0
    %1536 = vmatprep.mubr.bf16.mxu0 0
    %1537 = vmatmul.mubr.bf16.gmra.mxu0 %v1451
    %v1538 = vpop.f32.mrf.mxu0
    %v1539 = vadd.f32 0.0, %v1538
    %v1540 = vpop.f32.mrf.mxu0
    %v1541 = vpop.f32.mrf.mxu0
    %v1542 = vadd.f32 0.0, %v1541
    %v1543 = vpop.f32.mrf.mxu0
    %1544 = vmatprep.mubr.bf16.mxu0 0
    %1545 = vmatmul.mubr.bf16.gmra.mxu0 %v1454
    %v1546 = vpop.f32.mrf.mxu0
    %v1547 = vadd.f32 0.0, %v1546
    %v1548 = vpop.f32.mrf.mxu0
    %v1549 = vpop.f32.mrf.mxu0
    %v1550 = vadd.f32 0.0, %v1549
    %v1551 = vpop.f32.mrf.mxu0
    %1552 = vdwg.mxu0
    %v1553 = vpack.c.bf16 %v1494, %v1491
    %v1554 = vpack.c.bf16 %v1502, %v1499
    %v1555 = vpack.c.bf16 %v1510, %v1507
    %v1556 = vpack.c.bf16 %v1518, %v1515
    %v1557 = vpack.c.bf16 %v1526, %v1523
    %v1558 = vpack.c.bf16 %v1534, %v1531
    %v1559 = vpack.c.bf16 %v1542, %v1539
    %v1560 = vpack.c.bf16 %v1550, %v1547
    %v1561 = vld [vmem:[#allocation5] sm:$0xf]
    %v1562 = vld [vmem:[#allocation5 + $0x4] sm:$0xf]
    %v1563 = vld [vmem:[#allocation5 + $0x8] sm:$0xf]
    %v1564 = vld [vmem:[#allocation5 + $0xc] sm:$0xf]
    %v1565 = vld [vmem:[#allocation5 + $0x10] sm:$0xf]
    %v1566 = vld [vmem:[#allocation5 + $0x14] sm:$0xf]
    %v1567 = vld [vmem:[#allocation5 + $0x18] sm:$0xf]
    %v1568 = vld [vmem:[#allocation5 + $0x1c] sm:$0xf]
    %v1569 = vld [vmem:[#allocation5 + $0x20] sm:$0xf]
    %v1570 = vld [vmem:[#allocation5 + $0x24] sm:$0xf]
    %v1571 = vld [vmem:[#allocation5 + $0x28] sm:$0xf]
    %v1572 = vld [vmem:[#allocation5 + $0x2c] sm:$0xf]
    %v1573 = vld [vmem:[#allocation5 + $0x30] sm:$0xf]
    %v1574 = vld [vmem:[#allocation5 + $0x34] sm:$0xf]
    %v1575 = vld [vmem:[#allocation5 + $0x38] sm:$0xf]
    %v1576 = vld [vmem:[#allocation5 + $0x3c] sm:$0xf]
    %v1577 = vld [vmem:[%s6] sm:$0x1]
    %v1579 = vlaneseq
    %v1580 = vshrl.u32 %v1579, 7
    %v1581 = vsub.s32 0, %v1580
    %v1582 = vrot.slane %v1577, %v1581
    %v1600 = vunpack.c.l.b16 %v1561
    %v1601 = vunpack.c.l.b16 %v1562
    %v1602 = vunpack.c.l.b16 %v1563
    %v1603 = vunpack.c.l.b16 %v1564
    %v1604 = vunpack.c.l.b16 %v1565
    %v1605 = vunpack.c.l.b16 %v1566
    %v1606 = vunpack.c.l.b16 %v1567
    %v1607 = vunpack.c.l.b16 %v1568
    %v1608 = vunpack.c.l.b16 %v1569
    %v1609 = vunpack.c.l.b16 %v1570
    %v1610 = vunpack.c.l.b16 %v1571
    %v1611 = vunpack.c.l.b16 %v1572
    %v1612 = vunpack.c.l.b16 %v1573
    %v1613 = vunpack.c.l.b16 %v1574
    %v1614 = vunpack.c.l.b16 %v1575
    %v1615 = vunpack.c.l.b16 %v1576
    %v1616 = vpack.c.b16 %v1601, %v1600
    %v1617 = vpack.c.b16 %v1603, %v1602
    %v1618 = vpack.c.b16 %v1605, %v1604
    %v1619 = vpack.c.b16 %v1607, %v1606
    %v1620 = vpack.c.b16 %v1609, %v1608
    %v1621 = vpack.c.b16 %v1611, %v1610
    %v1622 = vpack.c.b16 %v1613, %v1612
    %v1623 = vpack.c.b16 %v1615, %v1614
    %1632 = vmatprep.subr.bf16.mxu0 0
    %1633 = vmatpush1.bf16.msra.mxu0 %v1623
    %1634 = vmatprep.subr.bf16.mxu0 0
    %1635 = vmatpush1.bf16.msra.mxu0 %v1622
    %1636 = vmatprep.subr.bf16.mxu0 0
    %1637 = vmatpush1.bf16.msra.mxu0 %v1621
    %1638 = vmatprep.subr.bf16.mxu0 0
    %1639 = vmatpush1.bf16.msra.mxu0 %v1620
    %1640 = vmatprep.subr.bf16.mxu0 0
    %1641 = vmatpush1.bf16.msra.mxu0 %v1619
    %1642 = vmatprep.subr.bf16.mxu0 0
    %1643 = vmatpush1.bf16.msra.mxu0 %v1618
    %1644 = vmatprep.subr.bf16.mxu0 0
    %1645 = vmatpush1.bf16.msra.mxu0 %v1617
    %1646 = vmatprep.subr.bf16.mxu0 0
    %1647 = vmatpush1.bf16.msra.mxu0 %v1616
    %1648 = vmatprep.subr.bf16.mxu0 0
    %1649 = vmatpush2.bf16.msra.mxu0 0
    %1650 = vmatprep.subr.bf16.mxu0 0
    %1651 = vmatpush2.bf16.msra.mxu0 0
    %1652 = vmatprep.subr.bf16.mxu0 0
    %1653 = vmatpush2.bf16.msra.mxu0 0
    %1654 = vmatprep.subr.bf16.mxu0 0
    %1655 = vmatpush2.bf16.msra.mxu0 0
    %1656 = vmatprep.subr.bf16.mxu0 0
    %1657 = vmatpush2.bf16.msra.mxu0 0
    %1658 = vmatprep.subr.bf16.mxu0 0
    %1659 = vmatpush2.bf16.msra.mxu0 0
    %1660 = vmatprep.subr.bf16.mxu0 0
    %1661 = vmatpush2.bf16.msra.mxu0 0
    %1662 = vmatprep.subr.bf16.mxu0 0
    %1663 = vmatpush2.bf16.msra.mxu0 0
    %1664 = vmatprep.mubr.bf16.mxu0 0
    %1665 = vmatmul.mubr.bf16.gmra.mxu0 %v1553
    %v1666 = vpop.f32.mrf.mxu0
    %v1667 = vadd.f32 %v1582, %v1666
    %v1668 = vpop.f32.mrf.mxu0
    %v1669 = vpop.f32.mrf.mxu0
    %v1670 = vadd.f32 %v1582, %v1669
    %v1671 = vpop.f32.mrf.mxu0
    %1672 = vmatprep.mubr.bf16.mxu0 0
    %1673 = vmatmul.mubr.bf16.gmra.mxu0 %v1554
    %v1674 = vpop.f32.mrf.mxu0
    %v1675 = vadd.f32 %v1582, %v1674
    %v1676 = vpop.f32.mrf.mxu0
    %v1677 = vpop.f32.mrf.mxu0
    %v1678 = vadd.f32 %v1582, %v1677
    %v1679 = vpop.f32.mrf.mxu0
    %1680 = vmatprep.mubr.bf16.mxu0 0
    %1681 = vmatmul.mubr.bf16.gmra.mxu0 %v1555
    %v1682 = vpop.f32.mrf.mxu0
    %v1683 = vadd.f32 %v1582, %v1682
    %v1684 = vpop.f32.mrf.mxu0
    %v1685 = vpop.f32.mrf.mxu0
    %v1686 = vadd.f32 %v1582, %v1685
    %v1687 = vpop.f32.mrf.mxu0
    %1688 = vmatprep.mubr.bf16.mxu0 0
    %1689 = vmatmul.mubr.bf16.gmra.mxu0 %v1556
    %v1690 = vpop.f32.mrf.mxu0
    %v1691 = vadd.f32 %v1582, %v1690
    %v1692 = vpop.f32.mrf.mxu0
    %v1693 = vpop.f32.mrf.mxu0
    %v1694 = vadd.f32 %v1582, %v1693
    %v1695 = vpop.f32.mrf.mxu0
    %1696 = vmatprep.mubr.bf16.mxu0 0
    %1697 = vmatmul.mubr.bf16.gmra.mxu0 %v1557
    %v1698 = vpop.f32.mrf.mxu0
    %v1699 = vadd.f32 %v1582, %v1698
    %v1700 = vpop.f32.mrf.mxu0
    %v1701 = vpop.f32.mrf.mxu0
    %v1702 = vadd.f32 %v1582, %v1701
    %v1703 = vpop.f32.mrf.mxu0
    %1704 = vmatprep.mubr.bf16.mxu0 0
    %1705 = vmatmul.mubr.bf16.gmra.mxu0 %v1558
    %v1706 = vpop.f32.mrf.mxu0
    %v1707 = vadd.f32 %v1582, %v1706
    %v1708 = vpop.f32.mrf.mxu0
    %v1709 = vpop.f32.mrf.mxu0
    %v1710 = vadd.f32 %v1582, %v1709
    %v1711 = vpop.f32.mrf.mxu0
    %1712 = vmatprep.mubr.bf16.mxu0 0
    %1713 = vmatmul.mubr.bf16.gmra.mxu0 %v1559
    %v1714 = vpop.f32.mrf.mxu0
    %v1715 = vadd.f32 %v1582, %v1714
    %v1716 = vpop.f32.mrf.mxu0
    %v1717 = vpop.f32.mrf.mxu0
    %v1718 = vadd.f32 %v1582, %v1717
    %v1719 = vpop.f32.mrf.mxu0
    %1720 = vmatprep.mubr.bf16.mxu0 0
    %1721 = vmatmul.mubr.bf16.gmra.mxu0 %v1560
    %v1722 = vpop.f32.mrf.mxu0
    %v1723 = vadd.f32 %v1582, %v1722
    %v1724 = vpop.f32.mrf.mxu0
    %v1725 = vpop.f32.mrf.mxu0
    %v1726 = vadd.f32 %v1582, %v1725
    %v1727 = vpop.f32.mrf.mxu0
    %1728 = vdwg.mxu0
    %1729 = vst [vmem:[#allocation7] sm:$0xff] %v1667
    %1730 = vst [vmem:[#allocation7 + $0x8] sm:$0xff] %v1670
    %1731 = vst [vmem:[#allocation7 + $0x10] sm:$0xff] %v1675
    %1732 = vst [vmem:[#allocation7 + $0x18] sm:$0xff] %v1678
    %1733 = vst [vmem:[#allocation7 + $0x20] sm:$0xff] %v1683
    %1734 = vst [vmem:[#allocation7 + $0x28] sm:$0xff] %v1686
    %1735 = vst [vmem:[#allocation7 + $0x30] sm:$0xff] %v1691
    %1736 = vst [vmem:[#allocation7 + $0x38] sm:$0xff] %v1694
    %1737 = vst [vmem:[#allocation7 + $0x40] sm:$0xff] %v1699
    %1738 = vst [vmem:[#allocation7 + $0x48] sm:$0xff] %v1702
    %1739 = vst [vmem:[#allocation7 + $0x50] sm:$0xff] %v1707
    %1740 = vst [vmem:[#allocation7 + $0x58] sm:$0xff] %v1710
    %1741 = vst [vmem:[#allocation7 + $0x60] sm:$0xff] %v1715
    %1742 = vst [vmem:[#allocation7 + $0x68] sm:$0xff] %v1718
    %1743 = vst [vmem:[#allocation7 + $0x70] sm:$0xff] %v1723
    %1744 = vst [vmem:[#allocation7 + $0x78] sm:$0xff] %v1726
    // Predicated region
    $region38: #{tpu_custom_call.1} parent=1 // pred_check
      _
    $region39: #{tpu_custom_call.1} parent=1 // pred_check_branch
      %1746 = sbr.rel (0) target = $region41
    $region40: #{tpu_custom_call.1} parent=1 // pred_region
      %s1748 = ssub.s32 2048, 2048
      %1749 = vsyncadd [#allocation4], %s1748
      %s1750 = sshll.u32 [#allocation7], 4
      %s1751 = int_to_ptr.vmem [resolvable:$true] %s1750
      %1756 = dma.vmem_to_hbm [thread:$0]  %s1751, 2048, %s7, [#allocation4], 128, 128, 8
    $region41: #{tpu_custom_call.1} parent=1 // pred_fallthru
      _
    // Predicated region
    $region42: #{tpu_custom_call.1} parent=1 // pred_check
      _
    $region43: #{tpu_custom_call.1} parent=1 // pred_check_branch
      %1758 = sbr.rel (0) target = $region45
    $region44: #{tpu_custom_call.1} parent=1 // pred_region
      %1759 = dma.done [#allocation4], 2048
    $region45: #{tpu_custom_call.1} parent=1 // pred_fallthru
      _
    %1760 = vsyncpa [#allocation3], 1
    %1761 = vsyncpa [#allocation6], 1
    %1762 = vsyncpa [#allocation4], 1

</llo_original>
